<compile_context>
chip_gen: v7x
topology: tpu7x:2x2x1
jax: 0.10.0
libtpu: 0.0.40
codegen_flags: <defaults>
</compile_context>

<pallas_src>
import math
import functools

import numpy as np
import jax
import jax.numpy as jnp
from jax import lax
from jax.experimental import pallas as pl
from jax.experimental.pallas import tpu as pltpu

STRIDES = [8, 16, 32, 64, 128]
MI = [[-1.0, 64.0], [64.0, 128.0], [128.0, 256.0], [256.0, 512.0], [512.0, 1e8]]
ALPHA = 0.25
GAMMA = 2.0
CLS_W, BOX_W, CTR_W = 1.0, 1.0, 1.0
CENTER_SAMPLE_RADIUS = 1.5
INF = 1e8
EPS = 1e-4

# aux field layout (leading dim of the (NUM_FIELDS, 8, M) slab)
F_RL, F_RT, F_RR, F_RB = 0, 1, 2, 3          # reg logits l, t, r, b
F_TL, F_TT, F_TR, F_TB = 4, 5, 6, 7          # target     l, t, r, b
F_CPRED, F_LABEL, F_CTGT, F_PX, F_PY = 8, 9, 10, 11, 12
NUM_FIELDS = 13


def _round_up(x, m):
    return ((x + m - 1) // m) * m


def _num_tensorcores():
    """Best-effort TensorCores-per-chip (2 on v7x, 1 on v5e/v6e). Default 1."""
    try:
        d = jax.devices()[0]
        v = getattr(d, "num_cores", None)
        if isinstance(v, (int, np.integer)) and v >= 1:
            return min(int(v), 2)
    except Exception:
        pass
    try:
        info = pltpu.get_tpu_info()
        for name in ("num_cores", "tensorcores_per_chip", "num_tensorcores",
                     "cores_per_chip"):
            v = getattr(info, name, None)
            if isinstance(v, (int, np.integer)) and v >= 1:
                return min(int(v), 2)
    except Exception:
        pass
    return 1


def _recip(x, approx=True):
    # approx reciprocal rides the EUP slot (idle relative to VALU in this kernel)
    if hasattr(pl, "reciprocal"):
        return pl.reciprocal(x, approx=approx)
    return 1.0 / x


# ----------------------------------------------------------------------------
# In-kernel atan (Cephes atanf). Mosaic has no atan lowering, so build it from
# abs / mul / add / where (VPU) and approx reciprocal (EUP).
# ----------------------------------------------------------------------------
def _atan_f32(x):
    sign = jnp.where(x < 0.0, -1.0, 1.0)
    ax = jnp.abs(x)
    tan3pi8 = 2.414213562373095
    tanpi8 = 0.4142135623730951
    big = ax > tan3pi8
    mid = jnp.logical_and(ax > tanpi8, jnp.logical_not(big))
    x_big = -_recip(jnp.maximum(ax, 1e-30))
    x_mid = (ax - 1.0) * _recip(ax + 1.0)
    xr = jnp.where(big, x_big, jnp.where(mid, x_mid, ax))
    yb = jnp.where(big, math.pi / 2.0, jnp.where(mid, math.pi / 4.0, 0.0))
    z = xr * xr
    poly = ((((8.05374449538e-2 * z - 1.38776856032e-1) * z
              + 1.99777106478e-1) * z - 3.33329491539e-1) * z * xr + xr)
    return sign * (yb + poly)


# ----------------------------------------------------------------------------
# Pallas kernel: per-tile focal / CIoU / centerness partial sums + positive count
# cls_ref (C, 8, tile_c), aux_ref (13, 8, tile_c), out_ref (8, 128).
# ----------------------------------------------------------------------------
def _fcos_loss_kernel(cls_ref, aux_ref, out_ref, *,
                      n_points, m_cols, tile_c, num_classes, alpha, gamma):
    c = pl.program_id(0)                  # core split ("parallel")
    j = pl.program_id(1)                  # column tile within split ("arbitrary")
    tile_idx = c * pl.num_programs(1) + j

    @pl.when(j == 0)
    def _init():
        out_ref[...] = jnp.zeros_like(out_ref)

    # ---------------- validity / positive masks: dense (8, tile_c) ----------
    lane = lax.broadcasted_iota(jnp.int32, (8, tile_c), 1)
    sub = lax.broadcasted_iota(jnp.int32, (8, tile_c), 0)
    col = tile_idx * tile_c + lane             # column index in the (8, M) layout
    flat = sub * m_cols + col                  # original flat point index
    valid = jnp.logical_and(col < m_cols, flat < n_points)

    label = aux_ref[F_LABEL].astype(jnp.float32)             # class id + 1
    pos = jnp.logical_and(label > 0.0, valid)

    # ---------------- focal (classification) loss: all valid points ---------
    # Per-class unrolled loop: label compared with a python constant (no class-id
    # iota slab), classes reduced first, tail mask applied once on (8, tile_c).
    label_i = label.astype(jnp.int32)
    col_focal = jnp.zeros((8, tile_c), jnp.float32)
    for cls_i in range(num_classes):
        p = jnp.clip(cls_ref[cls_i].astype(jnp.float32), EPS, 1.0 - EPS)
        onehot = label_i == (cls_i + 1)
        af = jnp.where(onehot, alpha, 1.0 - alpha)
        pt = jnp.where(onehot, p, 1.0 - p)
        omp = 1.0 - pt
        if float(gamma) == 2.0:
            mod = omp * omp
        else:
            mod = jnp.exp(gamma * jnp.log(jnp.maximum(omp, 1e-30)))
        # y*log(p) + (1-y)*log(1-p) == log(pt) for y in {0,1}: one log per class
        col_focal = col_focal + af * mod * (-jnp.log(pt))
    cls_sum = jnp.sum(jnp.where(valid, col_focal, 0.0))

    # ---------------- CIoU (regression) loss: positive points only ----------
    tl = aux_ref[F_TL].astype(jnp.float32)
    tt = aux_ref[F_TT].astype(jnp.float32)
    tr = aux_ref[F_TR].astype(jnp.float32)
    tb = aux_ref[F_TB].astype(jnp.float32)
    px = aux_ref[F_PX].astype(jnp.float32)
    py = aux_ref[F_PY].astype(jnp.float32)
    ctr_tgt = aux_ref[F_CTGT].astype(jnp.float32)

    # mask logits BEFORE exp: garbage / negative rows cannot overflow -> no NaN
    rl = jnp.exp(jnp.where(pos, aux_ref[F_RL].astype(jnp.float32), 0.0))
    rt = jnp.exp(jnp.where(pos, aux_ref[F_RT].astype(jnp.float32), 0.0))
    rr = jnp.exp(jnp.where(pos, aux_ref[F_RR].astype(jnp.float32), 0.0))
    rb = jnp.exp(jnp.where(pos, aux_ref[F_RB].astype(jnp.float32), 0.0))

    pred_x1 = px - rl
    pred_y1 = py - rt
    pred_x2 = px + rr
    pred_y2 = py + rb
    gt_x1 = px - tl
    gt_y1 = py - tt
    gt_x2 = px + tr
    gt_y2 = py + tb

    ov_w = jnp.maximum(jnp.minimum(pred_x2, gt_x2) - jnp.maximum(pred_x1, gt_x1), 0.0)
    ov_h = jnp.maximum(jnp.minimum(pred_y2, gt_y2) - jnp.maximum(pred_y1, gt_y1), 0.0)
    overlap = ov_w * ov_h
    b1_w = jnp.maximum(pred_x2 - pred_x1, 0.0)
    b1_h = jnp.maximum(pred_y2 - pred_y1, 0.0)
    b2_w = jnp.maximum(gt_x2 - gt_x1, 0.0)
    b2_h = jnp.maximum(gt_y2 - gt_y1, 0.0)
    union = jnp.maximum(b1_w * b1_h + b2_w * b2_h - overlap, EPS)
    ious = overlap * _recip(union)

    enc_w = jnp.maximum(jnp.maximum(pred_x2, gt_x2) - jnp.minimum(pred_x1, gt_x1), 0.0)
    enc_h = jnp.maximum(jnp.maximum(pred_y2, gt_y2) - jnp.minimum(pred_y1, gt_y1), 0.0)
    c2 = jnp.maximum(enc_w * enc_w + enc_h * enc_h, EPS)
    dcx = (pred_x1 + pred_x2 - gt_x1 - gt_x2) * 0.5
    dcy = (pred_y1 + pred_y2 - gt_y1 - gt_y2) * 0.5
    p2 = dcx * dcx + dcy * dcy

    # tiny denominator guard only protects masked rows; positives have h > 0
    dat = (_atan_f32(b2_w * _recip(jnp.maximum(b2_h, 1e-10)))
           - _atan_f32(b1_w * _recip(jnp.maximum(b1_h, 1e-10))))
    v = (4.0 / (math.pi ** 2)) * dat * dat
    alpha_ciou = v * _recip(jnp.maximum(1.0 - ious + v, EPS))
    ciou = ious - (p2 * _recip(c2) + v * alpha_ciou)
    reg_sum = jnp.sum(jnp.where(pos, (1.0 - ciou) * ctr_tgt, 0.0))

    # ---------------- center-ness BCE loss: positive points only ------------
    ctr_p = jnp.clip(aux_ref[F_CPRED].astype(jnp.float32), EPS, 1.0 - EPS)
    ctr_bce = -(ctr_tgt * jnp.log(ctr_p) + (1.0 - ctr_tgt) * jnp.log(1.0 - ctr_p))
    ctr_sum = jnp.sum(jnp.where(pos, ctr_bce, 0.0))

    pos_cnt = jnp.sum(pos.astype(jnp.float32))

    # Accumulate the four scalars into the resident (8,128) output block.
    # With 16K-point tiles this is <0.5% of per-tile work; an SMEM scalar
    # accumulator was considered but the proven vector-only path is kept to
    # avoid a vector->scalar extract on the store side.
    sub8 = lax.broadcasted_iota(jnp.int32, (8, 128), 0)
    ln8 = lax.broadcasted_iota(jnp.int32, (8, 128), 1)
    row0 = sub8 == 0
    partial = (jnp.where(row0 & (ln8 == 0), cls_sum, 0.0)
               + jnp.where(row0 & (ln8 == 1), reg_sum, 0.0)
               + jnp.where(row0 & (ln8 == 2), ctr_sum, 0.0)
               + jnp.where(row0 & (ln8 == 3), pos_cnt, 0.0))
    out_ref[...] = out_ref[...] + partial


def fcos_losses_pallas(cls3, aux3, n_points, num_classes, tile_c=2048,
                       num_core_splits=None):
    """cls3: (C, 8, M) probabilities; aux3: (NUM_FIELDS, 8, M) packed fields."""
    m_cols = int(cls3.shape[2])
    if num_core_splits is None:
        num_core_splits = _num_tensorcores()

    # Large column tiles (tile_c=2048 -> 16384 points) amortize the ~0.35us
    # per-grid-step overhead; shrink (multiple of 128) for tiny inputs.
    tile_c = int(min(tile_c, max(128, _round_up(m_cols, 128))))
    num_tiles = pl.cdiv(m_cols, tile_c)
    if num_core_splits > 1 and num_tiles < num_core_splits:
        # keep >= 1 tile per TensorCore on multi-TC parts (v7x) when possible
        shrunk = max(128, _round_up(pl.cdiv(m_cols, num_core_splits), 128))
        if pl.cdiv(m_cols, shrunk) >= num_core_splits:
            tile_c = shrunk
            num_tiles = pl.cdiv(m_cols, tile_c)
    num_splits = max(1, min(num_core_splits, num_tiles))
    tiles_per_split = pl.cdiv(num_tiles, num_splits)
    last_tile = num_tiles - 1

    # Clamp the column block index; the duplicate tail tile (only possible when
    # num_splits > 1) is zeroed in-kernel by the `valid` mask, which is derived
    # from the UNCLAMPED tile index.
    def col_map(c, j):
        return (0, 0, jnp.minimum(c * tiles_per_split + j, last_tile))

    kernel = functools.partial(_fcos_loss_kernel, n_points=n_points,
                               m_cols=m_cols, tile_c=tile_c,
                               num_classes=num_classes, alpha=ALPHA, gamma=GAMMA)
    out = pl.pallas_call(
        kernel,
        out_shape=jax.ShapeDtypeStruct((num_splits * 8, 128), jnp.float32),
        grid=(num_splits, tiles_per_split),
        in_specs=[
            pl.BlockSpec((num_classes, 8, tile_c), col_map),
            pl.BlockSpec((NUM_FIELDS, 8, tile_c), col_map),
        ],
        out_specs=pl.BlockSpec((8, 128), lambda c, j: (c, 0)),
        compiler_params=pltpu.CompilerParams(
            dimension_semantics=("parallel", "arbitrary")),
    )(cls3, aux3)

    sums = jnp.sum(out, axis=0)                       # combine per-core partials
    cls_sum, reg_sum, ctr_sum, pos_cnt = sums[0], sums[1], sums[2], sums[3]
    denom = jnp.maximum(pos_cnt, 1.0)
    has_pos = pos_cnt > 0
    cls_loss = jnp.where(has_pos, cls_sum / denom, 0.0)
    reg_loss = jnp.where(has_pos, reg_sum / denom, 0.0)
    ctr_loss = jnp.where(has_pos, ctr_sum / denom, 0.0)
    return cls_loss, reg_loss, ctr_loss


# ----------------------------------------------------------------------------
# Glue: FCOS positions + target assignment (vectorized, mask-based)
# ----------------------------------------------------------------------------
def fcos_positions(feature_hw, strides):
    all_pos = []
    for (h, w), s in zip(feature_hw, strides):
        sx = (np.arange(w, dtype=np.float32) + 0.5) * s
        sy = (np.arange(h, dtype=np.float32) + 0.5) * s
        px, py = np.meshgrid(sx, sy)                  # (h, w) each, pos = (x, y)
        pos = np.stack([px, py], axis=-1).astype(np.float32).reshape(-1, 2)
        all_pos.append(pos)
    return all_pos


def assign_targets_one_image(positions, mi, stride, ann):
    # positions:(P,2)  mi:(P,2)  stride:(P,1)  ann:(A,5)
    P = positions.shape[0]
    valid_ann = ann[:, 4] >= 0                                 # (A,) bool
    gt = ann[:, 0:4]
    pos_xy = positions[:, None, :]                             # (P,1,2)
    lt = pos_xy - gt[None, :, 0:2]
    rb = gt[None, :, 2:4] - pos_xy
    cand = jnp.concatenate([lt, rb], axis=-1)                  # (P,A,4)
    inside = jnp.min(cand, axis=-1) > 0.0                      # (P,A)
    # center sampling
    gt_ctr = (gt[:, 0:2] + gt[:, 2:4]) * 0.5                   # (A,2)
    dist = jnp.sqrt(jnp.sum((pos_xy - gt_ctr[None]) ** 2, axis=-1))       # (P,A)
    near = dist < stride * CENTER_SAMPLE_RADIUS                # (P,A)
    pre = valid_ann[None, :] & inside & near                   # (P,A)
    cand = cand * pre[..., None].astype(jnp.float32)
    # scale range (mi) filtering — max computed once, used for both bounds
    cand_max = jnp.max(cand, axis=-1)                          # (P,A)
    keep = pre & (cand_max > mi[:, 0:1]) & (cand_max < mi[:, 1:2])
    cand = cand * keep[..., None].astype(jnp.float32)
    final_flag = jnp.sum(cand, axis=(1, 2)) > 0.0              # (P,)
    # pick the surviving candidate with minimal GT area
    gts_wh = gt[:, 2:4] - gt[:, 0:2]
    gts_area = gts_wh[:, 0] * gts_wh[:, 1]                     # (A,)
    cand_val = jnp.sum(cand, axis=2)                           # (P,A)
    areas = jnp.where(cand_val == 0.0, INF, gts_area[None, :])
    min_idx = jnp.argmin(areas, axis=1)                        # (P,)
    sel_cand = cand[jnp.arange(P), min_idx]                    # (P,4)
    sel_cls = ann[min_idx, 4] + 1.0                            # (P,)
    l, t, r, b = sel_cand[:, 0], sel_cand[:, 1], sel_cand[:, 2], sel_cand[:, 3]
    ctrness = jnp.sqrt((jnp.minimum(l, r) / jnp.maximum(l, r)) *
                       (jnp.minimum(t, b) / jnp.maximum(t, b)))
    flag = final_flag.astype(jnp.float32)[:, None]
    tgt = jnp.concatenate([
        sel_cand * flag,
        sel_cls[:, None] * flag,
        jnp.where(final_flag[:, None], ctrness[:, None], 0.0),
    ], axis=1)                                                 # (P,6)
    return tgt


def fcos_loss_forward(cls_heads, reg_heads, center_heads, annotations):
    B = annotations.shape[0]
    num_classes = cls_heads[0].shape[-1]
    feature_hw = [(c.shape[1], c.shape[2]) for c in cls_heads]

    pos_np = fcos_positions(feature_hw, STRIDES)
    mi_np, st_np = [], []
    for (h, w), s, m in zip(feature_hw, STRIDES, MI):
        npts = h * w
        mi_np.append(np.tile(np.asarray(m, np.float32), (npts, 1)))
        st_np.append(np.full((npts, 1), s, np.float32))
    positions = jnp.asarray(np.concatenate(pos_np, axis=0))    # (P,2)
    mi = jnp.asarray(np.concatenate(mi_np, axis=0))            # (P,2)
    stride = jnp.asarray(np.concatenate(st_np, axis=0))        # (P,1)

    # TODO(synk): at real image sizes (800-1024 px) this (B,P,A,*) assignment glue
    # and the NHWC -> (rows, 8, N/8) relayout below dominate wall clock; fold both
    # into a Pallas kernel with annotations scalar-prefetched into SMEM
    # (PrefetchScalarGridSpec) so only one field-major pack is ever written.
    assign = jax.vmap(assign_targets_one_image, in_axes=(None, None, None, 0))
    tgt6 = assign(positions, mi, stride, annotations)          # (B,P,6)
    P = positions.shape[0]
    N = B * P
    pos_b = jnp.broadcast_to(positions[None], (B, P, 2))

    reg_bp = jnp.concatenate([r.reshape(B, -1, 4) for r in reg_heads], axis=1)
    ctr_bp = jnp.concatenate([c.reshape(B, -1, 1) for c in center_heads], axis=1)
    cls_bpc = jnp.concatenate([c.reshape(B, -1, num_classes) for c in cls_heads],
                              axis=1)                          # (B,P,C)

    # Build aux directly in field-major (NUM_FIELDS, N) order: no large (B,P,16)
    # intermediate + transpose (roughly halves the wrapper relayout traffic).
    fields = [
        reg_bp[..., 0], reg_bp[..., 1], reg_bp[..., 2], reg_bp[..., 3],
        tgt6[..., 0], tgt6[..., 1], tgt6[..., 2], tgt6[..., 3],
        ctr_bp[..., 0], tgt6[..., 4], tgt6[..., 5],
        pos_b[..., 0], pos_b[..., 1],
    ]
    aux = jnp.stack([f.reshape(N).astype(jnp.float32) for f in fields], axis=0)
    cls_t = jnp.transpose(cls_bpc, (2, 0, 1)).reshape(num_classes, N)

    # Pad N to a multiple of 8 and fold into the sublane+lane dense (rows, 8, M)
    # layout so every per-point field is a full (8, lanes) slab in the kernel.
    # NOTE: on mem-bound v5e/v6e, casting cls_t/aux here to bfloat16 would halve
    # the kernel's HBM traffic; kept float32 to match the PyTorch reference.
    m_cols = -(-N // 8)
    pad = 8 * m_cols - N
    if pad:
        aux = jnp.pad(aux, ((0, 0), (0, pad)))
        cls_t = jnp.pad(cls_t, ((0, 0), (0, pad)))
    aux3 = aux.reshape(NUM_FIELDS, 8, m_cols)
    cls3 = cls_t.reshape(num_classes, 8, m_cols).astype(jnp.float32)

    cls_loss, reg_loss, ctr_loss = fcos_losses_pallas(cls3, aux3, N, num_classes)
    return ({'cls_loss': CLS_W * cls_loss,
             'reg_loss': BOX_W * reg_loss,
             'center_ness_loss': CTR_W * ctr_loss},
            (cls3, aux3, N))


# ----------------------------------------------------------------------------
# Pure-JAX reference of the loss math (sanity check of the kernel)
# ----------------------------------------------------------------------------
def _losses_reference(cls3, aux3, n, num_classes):
    m = cls3.shape[2]
    cls_flat = cls3.reshape(num_classes, 8 * m)[:, :n].T         # (N, C)
    aux = aux3.reshape(NUM_FIELDS, 8 * m)[:, :n]                 # (F, N)

    reg_flat = aux[F_RL:F_RB + 1].T                              # (N,4)
    tgt_ltrb = aux[F_TL:F_TB + 1].T                              # (N,4)
    ctr_flat = aux[F_CPRED:F_CPRED + 1].T                        # (N,1)
    label = aux[F_LABEL:F_LABEL + 1].T                           # (N,1)
    ctr_tgt = aux[F_CTGT:F_CTGT + 1].T                           # (N,1)
    pxy = aux[F_PX:F_PY + 1].T                                   # (N,2)

    cls_p = jnp.clip(cls_flat, EPS, 1.0 - EPS)
    ctr_p = jnp.clip(ctr_flat, EPS, 1.0 - EPS)
    reg_p = jnp.exp(reg_flat)
    pos = (label > 0.0).astype(jnp.float32)
    pos_cnt = jnp.sum(pos)

    cids = jnp.arange(1, num_classes + 1, dtype=jnp.float32)[None, :]
    onehot = (cids == label).astype(jnp.float32)
    af = jnp.where(onehot == 1.0, ALPHA, 1.0 - ALPHA)
    pt = jnp.where(onehot == 1.0, cls_p, 1.0 - cls_p)
    bce = -(onehot * jnp.log(cls_p) + (1.0 - onehot) * jnp.log(1.0 - cls_p))
    cls_sum = jnp.sum(af * (1.0 - pt) ** 2 * bce)

    p_min, p_max = pxy - reg_p[:, 0:2], pxy + reg_p[:, 2:4]
    g_min, g_max = pxy - tgt_ltrb[:, 0:2], pxy + tgt_ltrb[:, 2:4]
    ov = jnp.maximum(jnp.minimum(p_max, g_max) - jnp.maximum(p_min, g_min), 0.0)
    overlap = ov[:, 0:1] * ov[:, 1:2]
    w1h1 = jnp.maximum(p_max - p_min, 0.0)
    w2h2 = jnp.maximum(g_max - g_min, 0.0)
    union = jnp.maximum(w1h1[:, 0:1] * w1h1[:, 1:2]
                        + w2h2[:, 0:1] * w2h2[:, 1:2] - overlap, EPS)
    ious = overlap / union
    enc = jnp.maximum(jnp.maximum(p_max, g_max) - jnp.minimum(p_min, g_min), 0.0)
    c2 = jnp.maximum(enc[:, 0:1] ** 2 + enc[:, 1:2] ** 2, EPS)
    dctr = (p_max + p_min) * 0.5 - (g_max + g_min) * 0.5
    p2 = dctr[:, 0:1] ** 2 + dctr[:, 1:2] ** 2
    v = (4.0 / math.pi ** 2) * (jnp.arctan(w2h2[:, 0:1] / jnp.maximum(w2h2[:, 1:2], 1e-10))
                                - jnp.arctan(w1h1[:, 0:1] / jnp.maximum(w1h1[:, 1:2], 1e-10))) ** 2
    a = v / jnp.maximum(1.0 - ious + v, EPS)
    ciou = ious - (p2 / c2 + v * a)
    reg_sum = jnp.sum((1.0 - ciou) * ctr_tgt * pos)

    ctr_sum = jnp.sum(-(ctr_tgt * jnp.log(ctr_p)
                        + (1.0 - ctr_tgt) * jnp.log(1.0 - ctr_p)) * pos)

    d = jnp.maximum(pos_cnt, 1.0)
    hp = pos_cnt > 0
    return {'cls_loss': jnp.where(hp, cls_sum / d, 0.0),
            'reg_loss': jnp.where(hp, reg_sum / d, 0.0),
            'center_ness_loss': jnp.where(hp, ctr_sum / d, 0.0)}


if __name__ == "__main__":
    B, C, IMG = 2, 20, 128
    key = jax.random.PRNGKey(0)
    keys = jax.random.split(key, 16)
    sizes = [(IMG // s, IMG // s) for s in STRIDES]   # (H, W): 16,8,4,2,1

    cls_heads, reg_heads, ctr_heads = [], [], []
    k = 0
    for (h, w) in sizes:
        cls_heads.append(jax.nn.sigmoid(jax.random.normal(keys[k], (B, h, w, C), jnp.float32))); k += 1
        reg_heads.append(0.5 * jax.random.normal(keys[k], (B, h, w, 4), jnp.float32)); k += 1
        ctr_heads.append(jax.nn.sigmoid(jax.random.normal(keys[k], (B, h, w, 1), jnp.float32))); k += 1

    annotations = jnp.array(
        [[[16., 16., 80., 80., 3.],
          [40., 24., 120., 112., 7.],
          [-1., -1., -1., -1., -1.]],
         [[8., 8., 120., 120., 1.],
          [-1., -1., -1., -1., -1.],
          [-1., -1., -1., -1., -1.]]], dtype=jnp.float32)

    loss_dict, (cls3, aux3, N) = fcos_loss_forward(cls_heads, reg_heads, ctr_heads,
                                                   annotations)
    loss_dict = {kk: jax.block_until_ready(vv) for kk, vv in loss_dict.items()}

    ref = _losses_reference(cls3, aux3, N, C)
    for kk in loss_dict:
        np.testing.assert_allclose(np.asarray(loss_dict[kk]), np.asarray(ref[kk]),
                                   rtol=1e-3, atol=1e-3)

    print("KERNEL_OK")
</pallas_src>

<mosaic_0001>
module attributes {stable_mosaic.version = 11 : i64} {
  func.func @_fcos_loss_kernel(%arg0: i32, %arg1: i32, %arg2: memref<20x8x128xf32, #tpu.memory_space<vmem>>, %arg3: memref<13x8x128xf32, #tpu.memory_space<vmem>>, %arg4: memref<8x128xf32, #tpu.memory_space<vmem>>) attributes {dimension_semantics = [#tpu.dimension_semantics<parallel>, #tpu.dimension_semantics<arbitrary>], iteration_bounds = array<i64: 1, 1>, scalar_prefetch = 0 : i64, scratch_operands = 0 : i64, tpu.core_type = #tpu.core_type<tc>, window_params = [{transform_indices = @transform_0, window_bounds = array<i64: 20, 8, 128>}, {transform_indices = @transform_1, window_bounds = array<i64: 13, 8, 128>}, {transform_indices = @transform_2, window_bounds = array<i64: 8, 128>}]} {
    %c1_i32 = arith.constant 1 : i32
    %0 = arith.muli %arg0, %c1_i32 : i32
    %1 = arith.addi %0, %arg1 : i32
    %c0_i32 = arith.constant 0 : i32
    %2 = arith.cmpi eq, %arg1, %c0_i32 : i32
    %3 = arith.extui %2 : i1 to i32
    %c0_i32_0 = arith.constant 0 : i32
    %4 = arith.cmpi ne, %3, %c0_i32_0 : i32
    scf.if %4 {
      %cst_304 = arith.constant 0.000000e+00 : f32
      %780 = vector.broadcast %cst_304 : f32 to vector<8x128xf32>
      %c0_305 = arith.constant 0 : index
      %c0_306 = arith.constant 0 : index
      %781 = vector.load %arg4[%c0_305, %c0_306] : memref<8x128xf32, #tpu.memory_space<vmem>>, vector<8x128xf32>
      tpu.vector_store %arg4[%c0_305, %c0_306], %780 {strides = array<i32>} : memref<8x128xf32, #tpu.memory_space<vmem>>, vector<8x128xf32>,
    } else {
    }
    %5 = tpu.iota {dimensions = array<i32: 1>} : vector<8x128xi32>
    %6 = tpu.iota {dimensions = array<i32: 0>} : vector<8x128xi32>
    %c128_i32 = arith.constant 128 : i32
    %7 = arith.muli %1, %c128_i32 : i32
    %8 = vector.broadcast %7 : i32 to vector<8x128xi32>
    %9 = arith.addi %8, %5 : vector<8x128xi32>
    %c86_i32 = arith.constant 86 : i32
    %10 = vector.broadcast %c86_i32 : i32 to vector<8x128xi32>
    %11 = arith.muli %6, %10 : vector<8x128xi32>
    %12 = arith.addi %11, %9 : vector<8x128xi32>
    %c86_i32_1 = arith.constant 86 : i32
    %13 = vector.broadcast %c86_i32_1 : i32 to vector<8x128xi32>
    %14 = arith.cmpi slt, %9, %13 : vector<8x128xi32>
    %c682_i32 = arith.constant 682 : i32
    %15 = vector.broadcast %c682_i32 : i32 to vector<8x128xi32>
    %16 = arith.cmpi slt, %12, %15 : vector<8x128xi32>
    %17 = arith.andi %14, %16 : vector<8x128xi1>
    %c9 = arith.constant 9 : index
    %c0 = arith.constant 0 : index
    %c0_2 = arith.constant 0 : index
    %18 = vector.load %arg3[%c9, %c0, %c0_2] : memref<13x8x128xf32, #tpu.memory_space<vmem>>, vector<1x8x128xf32>
    %19 = vector.shape_cast %18 : vector<1x8x128xf32> to vector<8x128xf32>
    %cst = arith.constant 0.000000e+00 : f32
    %20 = vector.broadcast %cst : f32 to vector<8x128xf32>
    %21 = arith.cmpf ogt, %19, %20 : vector<8x128xf32>
    %22 = arith.andi %21, %17 : vector<8x128xi1>
    %23 = arith.fptosi %19 : vector<8x128xf32> to vector<8x128xi32>
    %cst_3 = arith.constant 0.000000e+00 : f32
    %24 = vector.broadcast %cst_3 : f32 to vector<8x128xf32>
    %c0_4 = arith.constant 0 : index
    %c0_5 = arith.constant 0 : index
    %c0_6 = arith.constant 0 : index
    %25 = vector.load %arg2[%c0_4, %c0_5, %c0_6] : memref<20x8x128xf32, #tpu.memory_space<vmem>>, vector<1x8x128xf32>
    %26 = vector.shape_cast %25 : vector<1x8x128xf32> to vector<8x128xf32>
    %cst_7 = arith.constant 9.99999974E-5 : f32
    %cst_8 = arith.constant 0.999899983 : f32
    %27 = vector.broadcast %cst_7 : f32 to vector<8x128xf32>
    %28 = arith.maximumf %27, %26 : vector<8x128xf32>
    %29 = vector.broadcast %cst_8 : f32 to vector<8x128xf32>
    %30 = arith.minimumf %29, %28 : vector<8x128xf32>
    %c1_i32_9 = arith.constant 1 : i32
    %31 = vector.broadcast %c1_i32_9 : i32 to vector<8x128xi32>
    %32 = arith.cmpi eq, %23, %31 : vector<8x128xi32>
    %cst_10 = arith.constant 2.500000e-01 : f32
    %cst_11 = arith.constant 7.500000e-01 : f32
    %33 = vector.broadcast %cst_10 : f32 to vector<8x128xf32>
    %34 = vector.broadcast %cst_11 : f32 to vector<8x128xf32>
    %35 = arith.select %32, %33, %34 : vector<8x128xi1>, vector<8x128xf32>
    %cst_12 = arith.constant 1.000000e+00 : f32
    %36 = vector.broadcast %cst_12 : f32 to vector<8x128xf32>
    %37 = arith.subf %36, %30 : vector<8x128xf32>
    %38 = arith.select %32, %30, %37 : vector<8x128xi1>, vector<8x128xf32>
    %cst_13 = arith.constant 1.000000e+00 : f32
    %39 = vector.broadcast %cst_13 : f32 to vector<8x128xf32>
    %40 = arith.subf %39, %38 : vector<8x128xf32>
    %41 = arith.mulf %40, %40 : vector<8x128xf32>
    %42 = arith.mulf %35, %41 : vector<8x128xf32>
    %43 = math.log %38 : vector<8x128xf32>
    %cst_14 = arith.constant 0.000000e+00 : f32
    %44 = vector.broadcast %cst_14 : f32 to vector<8x128xf32>
    %45 = arith.subf %44, %43 : vector<8x128xf32>
    %46 = arith.mulf %42, %45 : vector<8x128xf32>
    %47 = arith.addf %24, %46 : vector<8x128xf32>
    %c1 = arith.constant 1 : index
    %c0_15 = arith.constant 0 : index
    %c0_16 = arith.constant 0 : index
    %48 = vector.load %arg2[%c1, %c0_15, %c0_16] : memref<20x8x128xf32, #tpu.memory_space<vmem>>, vector<1x8x128xf32>
    %49 = vector.shape_cast %48 : vector<1x8x128xf32> to vector<8x128xf32>
    %cst_17 = arith.constant 9.99999974E-5 : f32
    %cst_18 = arith.constant 0.999899983 : f32
    %50 = vector.broadcast %cst_17 : f32 to vector<8x128xf32>
    %51 = arith.maximumf %50, %49 : vector<8x128xf32>
    %52 = vector.broadcast %cst_18 : f32 to vector<8x128xf32>
    %53 = arith.minimumf %52, %51 : vector<8x128xf32>
    %c2_i32 = arith.constant 2 : i32
    %54 = vector.broadcast %c2_i32 : i32 to vector<8x128xi32>
    %55 = arith.cmpi eq, %23, %54 : vector<8x128xi32>
    %cst_19 = arith.constant 2.500000e-01 : f32
    %cst_20 = arith.constant 7.500000e-01 : f32
    %56 = vector.broadcast %cst_19 : f32 to vector<8x128xf32>
    %57 = vector.broadcast %cst_20 : f32 to vector<8x128xf32>
    %58 = arith.select %55, %56, %57 : vector<8x128xi1>, vector<8x128xf32>
    %cst_21 = arith.constant 1.000000e+00 : f32
    %59 = vector.broadcast %cst_21 : f32 to vector<8x128xf32>
    %60 = arith.subf %59, %53 : vector<8x128xf32>
    %61 = arith.select %55, %53, %60 : vector<8x128xi1>, vector<8x128xf32>
    %cst_22 = arith.constant 1.000000e+00 : f32
    %62 = vector.broadcast %cst_22 : f32 to vector<8x128xf32>
    %63 = arith.subf %62, %61 : vector<8x128xf32>
    %64 = arith.mulf %63, %63 : vector<8x128xf32>
    %65 = arith.mulf %58, %64 : vector<8x128xf32>
    %66 = math.log %61 : vector<8x128xf32>
    %cst_23 = arith.constant 0.000000e+00 : f32
    %67 = vector.broadcast %cst_23 : f32 to vector<8x128xf32>
    %68 = arith.subf %67, %66 : vector<8x128xf32>
    %69 = arith.mulf %65, %68 : vector<8x128xf32>
    %70 = arith.addf %47, %69 : vector<8x128xf32>
    %c2 = arith.constant 2 : index
    %c0_24 = arith.constant 0 : index
    %c0_25 = arith.constant 0 : index
    %71 = vector.load %arg2[%c2, %c0_24, %c0_25] : memref<20x8x128xf32, #tpu.memory_space<vmem>>, vector<1x8x128xf32>
    %72 = vector.shape_cast %71 : vector<1x8x128xf32> to vector<8x128xf32>
    %cst_26 = arith.constant 9.99999974E-5 : f32
    %cst_27 = arith.constant 0.999899983 : f32
    %73 = vector.broadcast %cst_26 : f32 to vector<8x128xf32>
    %74 = arith.maximumf %73, %72 : vector<8x128xf32>
    %75 = vector.broadcast %cst_27 : f32 to vector<8x128xf32>
    %76 = arith.minimumf %75, %74 : vector<8x128xf32>
    %c3_i32 = arith.constant 3 : i32
    %77 = vector.broadcast %c3_i32 : i32 to vector<8x128xi32>
    %78 = arith.cmpi eq, %23, %77 : vector<8x128xi32>
    %cst_28 = arith.constant 2.500000e-01 : f32
    %cst_29 = arith.constant 7.500000e-01 : f32
    %79 = vector.broadcast %cst_28 : f32 to vector<8x128xf32>
    %80 = vector.broadcast %cst_29 : f32 to vector<8x128xf32>
    %81 = arith.select %78, %79, %80 : vector<8x128xi1>, vector<8x128xf32>
    %cst_30 = arith.constant 1.000000e+00 : f32
    %82 = vector.broadcast %cst_30 : f32 to vector<8x128xf32>
    %83 = arith.subf %82, %76 : vector<8x128xf32>
    %84 = arith.select %78, %76, %83 : vector<8x128xi1>, vector<8x128xf32>
    %cst_31 = arith.constant 1.000000e+00 : f32
    %85 = vector.broadcast %cst_31 : f32 to vector<8x128xf32>
    %86 = arith.subf %85, %84 : vector<8x128xf32>
    %87 = arith.mulf %86, %86 : vector<8x128xf32>
    %88 = arith.mulf %81, %87 : vector<8x128xf32>
    %89 = math.log %84 : vector<8x128xf32>
    %cst_32 = arith.constant 0.000000e+00 : f32
    %90 = vector.broadcast %cst_32 : f32 to vector<8x128xf32>
    %91 = arith.subf %90, %89 : vector<8x128xf32>
    %92 = arith.mulf %88, %91 : vector<8x128xf32>
    %93 = arith.addf %70, %92 : vector<8x128xf32>
    %c3 = arith.constant 3 : index
    %c0_33 = arith.constant 0 : index
    %c0_34 = arith.constant 0 : index
    %94 = vector.load %arg2[%c3, %c0_33, %c0_34] : memref<20x8x128xf32, #tpu.memory_space<vmem>>, vector<1x8x128xf32>
    %95 = vector.shape_cast %94 : vector<1x8x128xf32> to vector<8x128xf32>
    %cst_35 = arith.constant 9.99999974E-5 : f32
    %cst_36 = arith.constant 0.999899983 : f32
    %96 = vector.broadcast %cst_35 : f32 to vector<8x128xf32>
    %97 = arith.maximumf %96, %95 : vector<8x128xf32>
    %98 = vector.broadcast %cst_36 : f32 to vector<8x128xf32>
    %99 = arith.minimumf %98, %97 : vector<8x128xf32>
    %c4_i32 = arith.constant 4 : i32
    %100 = vector.broadcast %c4_i32 : i32 to vector<8x128xi32>
    %101 = arith.cmpi eq, %23, %100 : vector<8x128xi32>
    %cst_37 = arith.constant 2.500000e-01 : f32
    %cst_38 = arith.constant 7.500000e-01 : f32
    %102 = vector.broadcast %cst_37 : f32 to vector<8x128xf32>
    %103 = vector.broadcast %cst_38 : f32 to vector<8x128xf32>
    %104 = arith.select %101, %102, %103 : vector<8x128xi1>, vector<8x128xf32>
    %cst_39 = arith.constant 1.000000e+00 : f32
    %105 = vector.broadcast %cst_39 : f32 to vector<8x128xf32>
    %106 = arith.subf %105, %99 : vector<8x128xf32>
    %107 = arith.select %101, %99, %106 : vector<8x128xi1>, vector<8x128xf32>
    %cst_40 = arith.constant 1.000000e+00 : f32
    %108 = vector.broadcast %cst_40 : f32 to vector<8x128xf32>
    %109 = arith.subf %108, %107 : vector<8x128xf32>
    %110 = arith.mulf %109, %109 : vector<8x128xf32>
    %111 = arith.mulf %104, %110 : vector<8x128xf32>
    %112 = math.log %107 : vector<8x128xf32>
    %cst_41 = arith.constant 0.000000e+00 : f32
    %113 = vector.broadcast %cst_41 : f32 to vector<8x128xf32>
    %114 = arith.subf %113, %112 : vector<8x128xf32>
    %115 = arith.mulf %111, %114 : vector<8x128xf32>
    %116 = arith.addf %93, %115 : vector<8x128xf32>
    %c4 = arith.constant 4 : index
    %c0_42 = arith.constant 0 : index
    %c0_43 = arith.constant 0 : index
    %117 = vector.load %arg2[%c4, %c0_42, %c0_43] : memref<20x8x128xf32, #tpu.memory_space<vmem>>, vector<1x8x128xf32>
    %118 = vector.shape_cast %117 : vector<1x8x128xf32> to vector<8x128xf32>
    %cst_44 = arith.constant 9.99999974E-5 : f32
    %cst_45 = arith.constant 0.999899983 : f32
    %119 = vector.broadcast %cst_44 : f32 to vector<8x128xf32>
    %120 = arith.maximumf %119, %118 : vector<8x128xf32>
    %121 = vector.broadcast %cst_45 : f32 to vector<8x128xf32>
    %122 = arith.minimumf %121, %120 : vector<8x128xf32>
    %c5_i32 = arith.constant 5 : i32
    %123 = vector.broadcast %c5_i32 : i32 to vector<8x128xi32>
    %124 = arith.cmpi eq, %23, %123 : vector<8x128xi32>
    %cst_46 = arith.constant 2.500000e-01 : f32
    %cst_47 = arith.constant 7.500000e-01 : f32
    %125 = vector.broadcast %cst_46 : f32 to vector<8x128xf32>
    %126 = vector.broadcast %cst_47 : f32 to vector<8x128xf32>
    %127 = arith.select %124, %125, %126 : vector<8x128xi1>, vector<8x128xf32>
    %cst_48 = arith.constant 1.000000e+00 : f32
    %128 = vector.broadcast %cst_48 : f32 to vector<8x128xf32>
    %129 = arith.subf %128, %122 : vector<8x128xf32>
    %130 = arith.select %124, %122, %129 : vector<8x128xi1>, vector<8x128xf32>
    %cst_49 = arith.constant 1.000000e+00 : f32
    %131 = vector.broadcast %cst_49 : f32 to vector<8x128xf32>
    %132 = arith.subf %131, %130 : vector<8x128xf32>
    %133 = arith.mulf %132, %132 : vector<8x128xf32>
    %134 = arith.mulf %127, %133 : vector<8x128xf32>
    %135 = math.log %130 : vector<8x128xf32>
    %cst_50 = arith.constant 0.000000e+00 : f32
    %136 = vector.broadcast %cst_50 : f32 to vector<8x128xf32>
    %137 = arith.subf %136, %135 : vector<8x128xf32>
    %138 = arith.mulf %134, %137 : vector<8x128xf32>
    %139 = arith.addf %116, %138 : vector<8x128xf32>
    %c5 = arith.constant 5 : index
    %c0_51 = arith.constant 0 : index
    %c0_52 = arith.constant 0 : index
    %140 = vector.load %arg2[%c5, %c0_51, %c0_52] : memref<20x8x128xf32, #tpu.memory_space<vmem>>, vector<1x8x128xf32>
    %141 = vector.shape_cast %140 : vector<1x8x128xf32> to vector<8x128xf32>
    %cst_53 = arith.constant 9.99999974E-5 : f32
    %cst_54 = arith.constant 0.999899983 : f32
    %142 = vector.broadcast %cst_53 : f32 to vector<8x128xf32>
    %143 = arith.maximumf %142, %141 : vector<8x128xf32>
    %144 = vector.broadcast %cst_54 : f32 to vector<8x128xf32>
    %145 = arith.minimumf %144, %143 : vector<8x128xf32>
    %c6_i32 = arith.constant 6 : i32
    %146 = vector.broadcast %c6_i32 : i32 to vector<8x128xi32>
    %147 = arith.cmpi eq, %23, %146 : vector<8x128xi32>
    %cst_55 = arith.constant 2.500000e-01 : f32
    %cst_56 = arith.constant 7.500000e-01 : f32
    %148 = vector.broadcast %cst_55 : f32 to vector<8x128xf32>
    %149 = vector.broadcast %cst_56 : f32 to vector<8x128xf32>
    %150 = arith.select %147, %148, %149 : vector<8x128xi1>, vector<8x128xf32>
    %cst_57 = arith.constant 1.000000e+00 : f32
    %151 = vector.broadcast %cst_57 : f32 to vector<8x128xf32>
    %152 = arith.subf %151, %145 : vector<8x128xf32>
    %153 = arith.select %147, %145, %152 : vector<8x128xi1>, vector<8x128xf32>
    %cst_58 = arith.constant 1.000000e+00 : f32
    %154 = vector.broadcast %cst_58 : f32 to vector<8x128xf32>
    %155 = arith.subf %154, %153 : vector<8x128xf32>
    %156 = arith.mulf %155, %155 : vector<8x128xf32>
    %157 = arith.mulf %150, %156 : vector<8x128xf32>
    %158 = math.log %153 : vector<8x128xf32>
    %cst_59 = arith.constant 0.000000e+00 : f32
    %159 = vector.broadcast %cst_59 : f32 to vector<8x128xf32>
    %160 = arith.subf %159, %158 : vector<8x128xf32>
    %161 = arith.mulf %157, %160 : vector<8x128xf32>
    %162 = arith.addf %139, %161 : vector<8x128xf32>
    %c6 = arith.constant 6 : index
    %c0_60 = arith.constant 0 : index
    %c0_61 = arith.constant 0 : index
    %163 = vector.load %arg2[%c6, %c0_60, %c0_61] : memref<20x8x128xf32, #tpu.memory_space<vmem>>, vector<1x8x128xf32>
    %164 = vector.shape_cast %163 : vector<1x8x128xf32> to vector<8x128xf32>
    %cst_62 = arith.constant 9.99999974E-5 : f32
    %cst_63 = arith.constant 0.999899983 : f32
    %165 = vector.broadcast %cst_62 : f32 to vector<8x128xf32>
    %166 = arith.maximumf %165, %164 : vector<8x128xf32>
    %167 = vector.broadcast %cst_63 : f32 to vector<8x128xf32>
    %168 = arith.minimumf %167, %166 : vector<8x128xf32>
    %c7_i32 = arith.constant 7 : i32
    %169 = vector.broadcast %c7_i32 : i32 to vector<8x128xi32>
    %170 = arith.cmpi eq, %23, %169 : vector<8x128xi32>
    %cst_64 = arith.constant 2.500000e-01 : f32
    %cst_65 = arith.constant 7.500000e-01 : f32
    %171 = vector.broadcast %cst_64 : f32 to vector<8x128xf32>
    %172 = vector.broadcast %cst_65 : f32 to vector<8x128xf32>
    %173 = arith.select %170, %171, %172 : vector<8x128xi1>, vector<8x128xf32>
    %cst_66 = arith.constant 1.000000e+00 : f32
    %174 = vector.broadcast %cst_66 : f32 to vector<8x128xf32>
    %175 = arith.subf %174, %168 : vector<8x128xf32>
    %176 = arith.select %170, %168, %175 : vector<8x128xi1>, vector<8x128xf32>
    %cst_67 = arith.constant 1.000000e+00 : f32
    %177 = vector.broadcast %cst_67 : f32 to vector<8x128xf32>
    %178 = arith.subf %177, %176 : vector<8x128xf32>
    %179 = arith.mulf %178, %178 : vector<8x128xf32>
    %180 = arith.mulf %173, %179 : vector<8x128xf32>
    %181 = math.log %176 : vector<8x128xf32>
    %cst_68 = arith.constant 0.000000e+00 : f32
    %182 = vector.broadcast %cst_68 : f32 to vector<8x128xf32>
    %183 = arith.subf %182, %181 : vector<8x128xf32>
    %184 = arith.mulf %180, %183 : vector<8x128xf32>
    %185 = arith.addf %162, %184 : vector<8x128xf32>
    %c7 = arith.constant 7 : index
    %c0_69 = arith.constant 0 : index
    %c0_70 = arith.constant 0 : index
    %186 = vector.load %arg2[%c7, %c0_69, %c0_70] : memref<20x8x128xf32, #tpu.memory_space<vmem>>, vector<1x8x128xf32>
    %187 = vector.shape_cast %186 : vector<1x8x128xf32> to vector<8x128xf32>
    %cst_71 = arith.constant 9.99999974E-5 : f32
    %cst_72 = arith.constant 0.999899983 : f32
    %188 = vector.broadcast %cst_71 : f32 to vector<8x128xf32>
    %189 = arith.maximumf %188, %187 : vector<8x128xf32>
    %190 = vector.broadcast %cst_72 : f32 to vector<8x128xf32>
    %191 = arith.minimumf %190, %189 : vector<8x128xf32>
    %c8_i32 = arith.constant 8 : i32
    %192 = vector.broadcast %c8_i32 : i32 to vector<8x128xi32>
    %193 = arith.cmpi eq, %23, %192 : vector<8x128xi32>
    %cst_73 = arith.constant 2.500000e-01 : f32
    %cst_74 = arith.constant 7.500000e-01 : f32
    %194 = vector.broadcast %cst_73 : f32 to vector<8x128xf32>
    %195 = vector.broadcast %cst_74 : f32 to vector<8x128xf32>
    %196 = arith.select %193, %194, %195 : vector<8x128xi1>, vector<8x128xf32>
    %cst_75 = arith.constant 1.000000e+00 : f32
    %197 = vector.broadcast %cst_75 : f32 to vector<8x128xf32>
    %198 = arith.subf %197, %191 : vector<8x128xf32>
    %199 = arith.select %193, %191, %198 : vector<8x128xi1>, vector<8x128xf32>
    %cst_76 = arith.constant 1.000000e+00 : f32
    %200 = vector.broadcast %cst_76 : f32 to vector<8x128xf32>
    %201 = arith.subf %200, %199 : vector<8x128xf32>
    %202 = arith.mulf %201, %201 : vector<8x128xf32>
    %203 = arith.mulf %196, %202 : vector<8x128xf32>
    %204 = math.log %199 : vector<8x128xf32>
    %cst_77 = arith.constant 0.000000e+00 : f32
    %205 = vector.broadcast %cst_77 : f32 to vector<8x128xf32>
    %206 = arith.subf %205, %204 : vector<8x128xf32>
    %207 = arith.mulf %203, %206 : vector<8x128xf32>
    %208 = arith.addf %185, %207 : vector<8x128xf32>
    %c8 = arith.constant 8 : index
    %c0_78 = arith.constant 0 : index
    %c0_79 = arith.constant 0 : index
    %209 = vector.load %arg2[%c8, %c0_78, %c0_79] : memref<20x8x128xf32, #tpu.memory_space<vmem>>, vector<1x8x128xf32>
    %210 = vector.shape_cast %209 : vector<1x8x128xf32> to vector<8x128xf32>
    %cst_80 = arith.constant 9.99999974E-5 : f32
    %cst_81 = arith.constant 0.999899983 : f32
    %211 = vector.broadcast %cst_80 : f32 to vector<8x128xf32>
    %212 = arith.maximumf %211, %210 : vector<8x128xf32>
    %213 = vector.broadcast %cst_81 : f32 to vector<8x128xf32>
    %214 = arith.minimumf %213, %212 : vector<8x128xf32>
    %c9_i32 = arith.constant 9 : i32
    %215 = vector.broadcast %c9_i32 : i32 to vector<8x128xi32>
    %216 = arith.cmpi eq, %23, %215 : vector<8x128xi32>
    %cst_82 = arith.constant 2.500000e-01 : f32
    %cst_83 = arith.constant 7.500000e-01 : f32
    %217 = vector.broadcast %cst_82 : f32 to vector<8x128xf32>
    %218 = vector.broadcast %cst_83 : f32 to vector<8x128xf32>
    %219 = arith.select %216, %217, %218 : vector<8x128xi1>, vector<8x128xf32>
    %cst_84 = arith.constant 1.000000e+00 : f32
    %220 = vector.broadcast %cst_84 : f32 to vector<8x128xf32>
    %221 = arith.subf %220, %214 : vector<8x128xf32>
    %222 = arith.select %216, %214, %221 : vector<8x128xi1>, vector<8x128xf32>
    %cst_85 = arith.constant 1.000000e+00 : f32
    %223 = vector.broadcast %cst_85 : f32 to vector<8x128xf32>
    %224 = arith.subf %223, %222 : vector<8x128xf32>
    %225 = arith.mulf %224, %224 : vector<8x128xf32>
    %226 = arith.mulf %219, %225 : vector<8x128xf32>
    %227 = math.log %222 : vector<8x128xf32>
    %cst_86 = arith.constant 0.000000e+00 : f32
    %228 = vector.broadcast %cst_86 : f32 to vector<8x128xf32>
    %229 = arith.subf %228, %227 : vector<8x128xf32>
    %230 = arith.mulf %226, %229 : vector<8x128xf32>
    %231 = arith.addf %208, %230 : vector<8x128xf32>
    %c9_87 = arith.constant 9 : index
    %c0_88 = arith.constant 0 : index
    %c0_89 = arith.constant 0 : index
    %232 = vector.load %arg2[%c9_87, %c0_88, %c0_89] : memref<20x8x128xf32, #tpu.memory_space<vmem>>, vector<1x8x128xf32>
    %233 = vector.shape_cast %232 : vector<1x8x128xf32> to vector<8x128xf32>
    %cst_90 = arith.constant 9.99999974E-5 : f32
    %cst_91 = arith.constant 0.999899983 : f32
    %234 = vector.broadcast %cst_90 : f32 to vector<8x128xf32>
    %235 = arith.maximumf %234, %233 : vector<8x128xf32>
    %236 = vector.broadcast %cst_91 : f32 to vector<8x128xf32>
    %237 = arith.minimumf %236, %235 : vector<8x128xf32>
    %c10_i32 = arith.constant 10 : i32
    %238 = vector.broadcast %c10_i32 : i32 to vector<8x128xi32>
    %239 = arith.cmpi eq, %23, %238 : vector<8x128xi32>
    %cst_92 = arith.constant 2.500000e-01 : f32
    %cst_93 = arith.constant 7.500000e-01 : f32
    %240 = vector.broadcast %cst_92 : f32 to vector<8x128xf32>
    %241 = vector.broadcast %cst_93 : f32 to vector<8x128xf32>
    %242 = arith.select %239, %240, %241 : vector<8x128xi1>, vector<8x128xf32>
    %cst_94 = arith.constant 1.000000e+00 : f32
    %243 = vector.broadcast %cst_94 : f32 to vector<8x128xf32>
    %244 = arith.subf %243, %237 : vector<8x128xf32>
    %245 = arith.select %239, %237, %244 : vector<8x128xi1>, vector<8x128xf32>
    %cst_95 = arith.constant 1.000000e+00 : f32
    %246 = vector.broadcast %cst_95 : f32 to vector<8x128xf32>
    %247 = arith.subf %246, %245 : vector<8x128xf32>
    %248 = arith.mulf %247, %247 : vector<8x128xf32>
    %249 = arith.mulf %242, %248 : vector<8x128xf32>
    %250 = math.log %245 : vector<8x128xf32>
    %cst_96 = arith.constant 0.000000e+00 : f32
    %251 = vector.broadcast %cst_96 : f32 to vector<8x128xf32>
    %252 = arith.subf %251, %250 : vector<8x128xf32>
    %253 = arith.mulf %249, %252 : vector<8x128xf32>
    %254 = arith.addf %231, %253 : vector<8x128xf32>
    %c10 = arith.constant 10 : index
    %c0_97 = arith.constant 0 : index
    %c0_98 = arith.constant 0 : index
    %255 = vector.load %arg2[%c10, %c0_97, %c0_98] : memref<20x8x128xf32, #tpu.memory_space<vmem>>, vector<1x8x128xf32>
    %256 = vector.shape_cast %255 : vector<1x8x128xf32> to vector<8x128xf32>
    %cst_99 = arith.constant 9.99999974E-5 : f32
    %cst_100 = arith.constant 0.999899983 : f32
    %257 = vector.broadcast %cst_99 : f32 to vector<8x128xf32>
    %258 = arith.maximumf %257, %256 : vector<8x128xf32>
    %259 = vector.broadcast %cst_100 : f32 to vector<8x128xf32>
    %260 = arith.minimumf %259, %258 : vector<8x128xf32>
    %c11_i32 = arith.constant 11 : i32
    %261 = vector.broadcast %c11_i32 : i32 to vector<8x128xi32>
    %262 = arith.cmpi eq, %23, %261 : vector<8x128xi32>
    %cst_101 = arith.constant 2.500000e-01 : f32
    %cst_102 = arith.constant 7.500000e-01 : f32
    %263 = vector.broadcast %cst_101 : f32 to vector<8x128xf32>
    %264 = vector.broadcast %cst_102 : f32 to vector<8x128xf32>
    %265 = arith.select %262, %263, %264 : vector<8x128xi1>, vector<8x128xf32>
    %cst_103 = arith.constant 1.000000e+00 : f32
    %266 = vector.broadcast %cst_103 : f32 to vector<8x128xf32>
    %267 = arith.subf %266, %260 : vector<8x128xf32>
    %268 = arith.select %262, %260, %267 : vector<8x128xi1>, vector<8x128xf32>
    %cst_104 = arith.constant 1.000000e+00 : f32
    %269 = vector.broadcast %cst_104 : f32 to vector<8x128xf32>
    %270 = arith.subf %269, %268 : vector<8x128xf32>
    %271 = arith.mulf %270, %270 : vector<8x128xf32>
    %272 = arith.mulf %265, %271 : vector<8x128xf32>
    %273 = math.log %268 : vector<8x128xf32>
    %cst_105 = arith.constant 0.000000e+00 : f32
    %274 = vector.broadcast %cst_105 : f32 to vector<8x128xf32>
    %275 = arith.subf %274, %273 : vector<8x128xf32>
    %276 = arith.mulf %272, %275 : vector<8x128xf32>
    %277 = arith.addf %254, %276 : vector<8x128xf32>
    %c11 = arith.constant 11 : index
    %c0_106 = arith.constant 0 : index
    %c0_107 = arith.constant 0 : index
    %278 = vector.load %arg2[%c11, %c0_106, %c0_107] : memref<20x8x128xf32, #tpu.memory_space<vmem>>, vector<1x8x128xf32>
    %279 = vector.shape_cast %278 : vector<1x8x128xf32> to vector<8x128xf32>
    %cst_108 = arith.constant 9.99999974E-5 : f32
    %cst_109 = arith.constant 0.999899983 : f32
    %280 = vector.broadcast %cst_108 : f32 to vector<8x128xf32>
    %281 = arith.maximumf %280, %279 : vector<8x128xf32>
    %282 = vector.broadcast %cst_109 : f32 to vector<8x128xf32>
    %283 = arith.minimumf %282, %281 : vector<8x128xf32>
    %c12_i32 = arith.constant 12 : i32
    %284 = vector.broadcast %c12_i32 : i32 to vector<8x128xi32>
    %285 = arith.cmpi eq, %23, %284 : vector<8x128xi32>
    %cst_110 = arith.constant 2.500000e-01 : f32
    %cst_111 = arith.constant 7.500000e-01 : f32
    %286 = vector.broadcast %cst_110 : f32 to vector<8x128xf32>
    %287 = vector.broadcast %cst_111 : f32 to vector<8x128xf32>
    %288 = arith.select %285, %286, %287 : vector<8x128xi1>, vector<8x128xf32>
    %cst_112 = arith.constant 1.000000e+00 : f32
    %289 = vector.broadcast %cst_112 : f32 to vector<8x128xf32>
    %290 = arith.subf %289, %283 : vector<8x128xf32>
    %291 = arith.select %285, %283, %290 : vector<8x128xi1>, vector<8x128xf32>
    %cst_113 = arith.constant 1.000000e+00 : f32
    %292 = vector.broadcast %cst_113 : f32 to vector<8x128xf32>
    %293 = arith.subf %292, %291 : vector<8x128xf32>
    %294 = arith.mulf %293, %293 : vector<8x128xf32>
    %295 = arith.mulf %288, %294 : vector<8x128xf32>
    %296 = math.log %291 : vector<8x128xf32>
    %cst_114 = arith.constant 0.000000e+00 : f32
    %297 = vector.broadcast %cst_114 : f32 to vector<8x128xf32>
    %298 = arith.subf %297, %296 : vector<8x128xf32>
    %299 = arith.mulf %295, %298 : vector<8x128xf32>
    %300 = arith.addf %277, %299 : vector<8x128xf32>
    %c12 = arith.constant 12 : index
    %c0_115 = arith.constant 0 : index
    %c0_116 = arith.constant 0 : index
    %301 = vector.load %arg2[%c12, %c0_115, %c0_116] : memref<20x8x128xf32, #tpu.memory_space<vmem>>, vector<1x8x128xf32>
    %302 = vector.shape_cast %301 : vector<1x8x128xf32> to vector<8x128xf32>
    %cst_117 = arith.constant 9.99999974E-5 : f32
    %cst_118 = arith.constant 0.999899983 : f32
    %303 = vector.broadcast %cst_117 : f32 to vector<8x128xf32>
    %304 = arith.maximumf %303, %302 : vector<8x128xf32>
    %305 = vector.broadcast %cst_118 : f32 to vector<8x128xf32>
    %306 = arith.minimumf %305, %304 : vector<8x128xf32>
    %c13_i32 = arith.constant 13 : i32
    %307 = vector.broadcast %c13_i32 : i32 to vector<8x128xi32>
    %308 = arith.cmpi eq, %23, %307 : vector<8x128xi32>
    %cst_119 = arith.constant 2.500000e-01 : f32
    %cst_120 = arith.constant 7.500000e-01 : f32
    %309 = vector.broadcast %cst_119 : f32 to vector<8x128xf32>
    %310 = vector.broadcast %cst_120 : f32 to vector<8x128xf32>
    %311 = arith.select %308, %309, %310 : vector<8x128xi1>, vector<8x128xf32>
    %cst_121 = arith.constant 1.000000e+00 : f32
    %312 = vector.broadcast %cst_121 : f32 to vector<8x128xf32>
    %313 = arith.subf %312, %306 : vector<8x128xf32>
    %314 = arith.select %308, %306, %313 : vector<8x128xi1>, vector<8x128xf32>
    %cst_122 = arith.constant 1.000000e+00 : f32
    %315 = vector.broadcast %cst_122 : f32 to vector<8x128xf32>
    %316 = arith.subf %315, %314 : vector<8x128xf32>
    %317 = arith.mulf %316, %316 : vector<8x128xf32>
    %318 = arith.mulf %311, %317 : vector<8x128xf32>
    %319 = math.log %314 : vector<8x128xf32>
    %cst_123 = arith.constant 0.000000e+00 : f32
    %320 = vector.broadcast %cst_123 : f32 to vector<8x128xf32>
    %321 = arith.subf %320, %319 : vector<8x128xf32>
    %322 = arith.mulf %318, %321 : vector<8x128xf32>
    %323 = arith.addf %300, %322 : vector<8x128xf32>
    %c13 = arith.constant 13 : index
    %c0_124 = arith.constant 0 : index
    %c0_125 = arith.constant 0 : index
    %324 = vector.load %arg2[%c13, %c0_124, %c0_125] : memref<20x8x128xf32, #tpu.memory_space<vmem>>, vector<1x8x128xf32>
    %325 = vector.shape_cast %324 : vector<1x8x128xf32> to vector<8x128xf32>
    %cst_126 = arith.constant 9.99999974E-5 : f32
    %cst_127 = arith.constant 0.999899983 : f32
    %326 = vector.broadcast %cst_126 : f32 to vector<8x128xf32>
    %327 = arith.maximumf %326, %325 : vector<8x128xf32>
    %328 = vector.broadcast %cst_127 : f32 to vector<8x128xf32>
    %329 = arith.minimumf %328, %327 : vector<8x128xf32>
    %c14_i32 = arith.constant 14 : i32
    %330 = vector.broadcast %c14_i32 : i32 to vector<8x128xi32>
    %331 = arith.cmpi eq, %23, %330 : vector<8x128xi32>
    %cst_128 = arith.constant 2.500000e-01 : f32
    %cst_129 = arith.constant 7.500000e-01 : f32
    %332 = vector.broadcast %cst_128 : f32 to vector<8x128xf32>
    %333 = vector.broadcast %cst_129 : f32 to vector<8x128xf32>
    %334 = arith.select %331, %332, %333 : vector<8x128xi1>, vector<8x128xf32>
    %cst_130 = arith.constant 1.000000e+00 : f32
    %335 = vector.broadcast %cst_130 : f32 to vector<8x128xf32>
    %336 = arith.subf %335, %329 : vector<8x128xf32>
    %337 = arith.select %331, %329, %336 : vector<8x128xi1>, vector<8x128xf32>
    %cst_131 = arith.constant 1.000000e+00 : f32
    %338 = vector.broadcast %cst_131 : f32 to vector<8x128xf32>
    %339 = arith.subf %338, %337 : vector<8x128xf32>
    %340 = arith.mulf %339, %339 : vector<8x128xf32>
    %341 = arith.mulf %334, %340 : vector<8x128xf32>
    %342 = math.log %337 : vector<8x128xf32>
    %cst_132 = arith.constant 0.000000e+00 : f32
    %343 = vector.broadcast %cst_132 : f32 to vector<8x128xf32>
    %344 = arith.subf %343, %342 : vector<8x128xf32>
    %345 = arith.mulf %341, %344 : vector<8x128xf32>
    %346 = arith.addf %323, %345 : vector<8x128xf32>
    %c14 = arith.constant 14 : index
    %c0_133 = arith.constant 0 : index
    %c0_134 = arith.constant 0 : index
    %347 = vector.load %arg2[%c14, %c0_133, %c0_134] : memref<20x8x128xf32, #tpu.memory_space<vmem>>, vector<1x8x128xf32>
    %348 = vector.shape_cast %347 : vector<1x8x128xf32> to vector<8x128xf32>
    %cst_135 = arith.constant 9.99999974E-5 : f32
    %cst_136 = arith.constant 0.999899983 : f32
    %349 = vector.broadcast %cst_135 : f32 to vector<8x128xf32>
    %350 = arith.maximumf %349, %348 : vector<8x128xf32>
    %351 = vector.broadcast %cst_136 : f32 to vector<8x128xf32>
    %352 = arith.minimumf %351, %350 : vector<8x128xf32>
    %c15_i32 = arith.constant 15 : i32
    %353 = vector.broadcast %c15_i32 : i32 to vector<8x128xi32>
    %354 = arith.cmpi eq, %23, %353 : vector<8x128xi32>
    %cst_137 = arith.constant 2.500000e-01 : f32
    %cst_138 = arith.constant 7.500000e-01 : f32
    %355 = vector.broadcast %cst_137 : f32 to vector<8x128xf32>
    %356 = vector.broadcast %cst_138 : f32 to vector<8x128xf32>
    %357 = arith.select %354, %355, %356 : vector<8x128xi1>, vector<8x128xf32>
    %cst_139 = arith.constant 1.000000e+00 : f32
    %358 = vector.broadcast %cst_139 : f32 to vector<8x128xf32>
    %359 = arith.subf %358, %352 : vector<8x128xf32>
    %360 = arith.select %354, %352, %359 : vector<8x128xi1>, vector<8x128xf32>
    %cst_140 = arith.constant 1.000000e+00 : f32
    %361 = vector.broadcast %cst_140 : f32 to vector<8x128xf32>
    %362 = arith.subf %361, %360 : vector<8x128xf32>
    %363 = arith.mulf %362, %362 : vector<8x128xf32>
    %364 = arith.mulf %357, %363 : vector<8x128xf32>
    %365 = math.log %360 : vector<8x128xf32>
    %cst_141 = arith.constant 0.000000e+00 : f32
    %366 = vector.broadcast %cst_141 : f32 to vector<8x128xf32>
    %367 = arith.subf %366, %365 : vector<8x128xf32>
    %368 = arith.mulf %364, %367 : vector<8x128xf32>
    %369 = arith.addf %346, %368 : vector<8x128xf32>
    %c15 = arith.constant 15 : index
    %c0_142 = arith.constant 0 : index
    %c0_143 = arith.constant 0 : index
    %370 = vector.load %arg2[%c15, %c0_142, %c0_143] : memref<20x8x128xf32, #tpu.memory_space<vmem>>, vector<1x8x128xf32>
    %371 = vector.shape_cast %370 : vector<1x8x128xf32> to vector<8x128xf32>
    %cst_144 = arith.constant 9.99999974E-5 : f32
    %cst_145 = arith.constant 0.999899983 : f32
    %372 = vector.broadcast %cst_144 : f32 to vector<8x128xf32>
    %373 = arith.maximumf %372, %371 : vector<8x128xf32>
    %374 = vector.broadcast %cst_145 : f32 to vector<8x128xf32>
    %375 = arith.minimumf %374, %373 : vector<8x128xf32>
    %c16_i32 = arith.constant 16 : i32
    %376 = vector.broadcast %c16_i32 : i32 to vector<8x128xi32>
    %377 = arith.cmpi eq, %23, %376 : vector<8x128xi32>
    %cst_146 = arith.constant 2.500000e-01 : f32
    %cst_147 = arith.constant 7.500000e-01 : f32
    %378 = vector.broadcast %cst_146 : f32 to vector<8x128xf32>
    %379 = vector.broadcast %cst_147 : f32 to vector<8x128xf32>
    %380 = arith.select %377, %378, %379 : vector<8x128xi1>, vector<8x128xf32>
    %cst_148 = arith.constant 1.000000e+00 : f32
    %381 = vector.broadcast %cst_148 : f32 to vector<8x128xf32>
    %382 = arith.subf %381, %375 : vector<8x128xf32>
    %383 = arith.select %377, %375, %382 : vector<8x128xi1>, vector<8x128xf32>
    %cst_149 = arith.constant 1.000000e+00 : f32
    %384 = vector.broadcast %cst_149 : f32 to vector<8x128xf32>
    %385 = arith.subf %384, %383 : vector<8x128xf32>
    %386 = arith.mulf %385, %385 : vector<8x128xf32>
    %387 = arith.mulf %380, %386 : vector<8x128xf32>
    %388 = math.log %383 : vector<8x128xf32>
    %cst_150 = arith.constant 0.000000e+00 : f32
    %389 = vector.broadcast %cst_150 : f32 to vector<8x128xf32>
    %390 = arith.subf %389, %388 : vector<8x128xf32>
    %391 = arith.mulf %387, %390 : vector<8x128xf32>
    %392 = arith.addf %369, %391 : vector<8x128xf32>
    %c16 = arith.constant 16 : index
    %c0_151 = arith.constant 0 : index
    %c0_152 = arith.constant 0 : index
    %393 = vector.load %arg2[%c16, %c0_151, %c0_152] : memref<20x8x128xf32, #tpu.memory_space<vmem>>, vector<1x8x128xf32>
    %394 = vector.shape_cast %393 : vector<1x8x128xf32> to vector<8x128xf32>
    %cst_153 = arith.constant 9.99999974E-5 : f32
    %cst_154 = arith.constant 0.999899983 : f32
    %395 = vector.broadcast %cst_153 : f32 to vector<8x128xf32>
    %396 = arith.maximumf %395, %394 : vector<8x128xf32>
    %397 = vector.broadcast %cst_154 : f32 to vector<8x128xf32>
    %398 = arith.minimumf %397, %396 : vector<8x128xf32>
    %c17_i32 = arith.constant 17 : i32
    %399 = vector.broadcast %c17_i32 : i32 to vector<8x128xi32>
    %400 = arith.cmpi eq, %23, %399 : vector<8x128xi32>
    %cst_155 = arith.constant 2.500000e-01 : f32
    %cst_156 = arith.constant 7.500000e-01 : f32
    %401 = vector.broadcast %cst_155 : f32 to vector<8x128xf32>
    %402 = vector.broadcast %cst_156 : f32 to vector<8x128xf32>
    %403 = arith.select %400, %401, %402 : vector<8x128xi1>, vector<8x128xf32>
    %cst_157 = arith.constant 1.000000e+00 : f32
    %404 = vector.broadcast %cst_157 : f32 to vector<8x128xf32>
    %405 = arith.subf %404, %398 : vector<8x128xf32>
    %406 = arith.select %400, %398, %405 : vector<8x128xi1>, vector<8x128xf32>
    %cst_158 = arith.constant 1.000000e+00 : f32
    %407 = vector.broadcast %cst_158 : f32 to vector<8x128xf32>
    %408 = arith.subf %407, %406 : vector<8x128xf32>
    %409 = arith.mulf %408, %408 : vector<8x128xf32>
    %410 = arith.mulf %403, %409 : vector<8x128xf32>
    %411 = math.log %406 : vector<8x128xf32>
    %cst_159 = arith.constant 0.000000e+00 : f32
    %412 = vector.broadcast %cst_159 : f32 to vector<8x128xf32>
    %413 = arith.subf %412, %411 : vector<8x128xf32>
    %414 = arith.mulf %410, %413 : vector<8x128xf32>
    %415 = arith.addf %392, %414 : vector<8x128xf32>
    %c17 = arith.constant 17 : index
    %c0_160 = arith.constant 0 : index
    %c0_161 = arith.constant 0 : index
    %416 = vector.load %arg2[%c17, %c0_160, %c0_161] : memref<20x8x128xf32, #tpu.memory_space<vmem>>, vector<1x8x128xf32>
    %417 = vector.shape_cast %416 : vector<1x8x128xf32> to vector<8x128xf32>
    %cst_162 = arith.constant 9.99999974E-5 : f32
    %cst_163 = arith.constant 0.999899983 : f32
    %418 = vector.broadcast %cst_162 : f32 to vector<8x128xf32>
    %419 = arith.maximumf %418, %417 : vector<8x128xf32>
    %420 = vector.broadcast %cst_163 : f32 to vector<8x128xf32>
    %421 = arith.minimumf %420, %419 : vector<8x128xf32>
    %c18_i32 = arith.constant 18 : i32
    %422 = vector.broadcast %c18_i32 : i32 to vector<8x128xi32>
    %423 = arith.cmpi eq, %23, %422 : vector<8x128xi32>
    %cst_164 = arith.constant 2.500000e-01 : f32
    %cst_165 = arith.constant 7.500000e-01 : f32
    %424 = vector.broadcast %cst_164 : f32 to vector<8x128xf32>
    %425 = vector.broadcast %cst_165 : f32 to vector<8x128xf32>
    %426 = arith.select %423, %424, %425 : vector<8x128xi1>, vector<8x128xf32>
    %cst_166 = arith.constant 1.000000e+00 : f32
    %427 = vector.broadcast %cst_166 : f32 to vector<8x128xf32>
    %428 = arith.subf %427, %421 : vector<8x128xf32>
    %429 = arith.select %423, %421, %428 : vector<8x128xi1>, vector<8x128xf32>
    %cst_167 = arith.constant 1.000000e+00 : f32
    %430 = vector.broadcast %cst_167 : f32 to vector<8x128xf32>
    %431 = arith.subf %430, %429 : vector<8x128xf32>
    %432 = arith.mulf %431, %431 : vector<8x128xf32>
    %433 = arith.mulf %426, %432 : vector<8x128xf32>
    %434 = math.log %429 : vector<8x128xf32>
    %cst_168 = arith.constant 0.000000e+00 : f32
    %435 = vector.broadcast %cst_168 : f32 to vector<8x128xf32>
    %436 = arith.subf %435, %434 : vector<8x128xf32>
    %437 = arith.mulf %433, %436 : vector<8x128xf32>
    %438 = arith.addf %415, %437 : vector<8x128xf32>
    %c18 = arith.constant 18 : index
    %c0_169 = arith.constant 0 : index
    %c0_170 = arith.constant 0 : index
    %439 = vector.load %arg2[%c18, %c0_169, %c0_170] : memref<20x8x128xf32, #tpu.memory_space<vmem>>, vector<1x8x128xf32>
    %440 = vector.shape_cast %439 : vector<1x8x128xf32> to vector<8x128xf32>
    %cst_171 = arith.constant 9.99999974E-5 : f32
    %cst_172 = arith.constant 0.999899983 : f32
    %441 = vector.broadcast %cst_171 : f32 to vector<8x128xf32>
    %442 = arith.maximumf %441, %440 : vector<8x128xf32>
    %443 = vector.broadcast %cst_172 : f32 to vector<8x128xf32>
    %444 = arith.minimumf %443, %442 : vector<8x128xf32>
    %c19_i32 = arith.constant 19 : i32
    %445 = vector.broadcast %c19_i32 : i32 to vector<8x128xi32>
    %446 = arith.cmpi eq, %23, %445 : vector<8x128xi32>
    %cst_173 = arith.constant 2.500000e-01 : f32
    %cst_174 = arith.constant 7.500000e-01 : f32
    %447 = vector.broadcast %cst_173 : f32 to vector<8x128xf32>
    %448 = vector.broadcast %cst_174 : f32 to vector<8x128xf32>
    %449 = arith.select %446, %447, %448 : vector<8x128xi1>, vector<8x128xf32>
    %cst_175 = arith.constant 1.000000e+00 : f32
    %450 = vector.broadcast %cst_175 : f32 to vector<8x128xf32>
    %451 = arith.subf %450, %444 : vector<8x128xf32>
    %452 = arith.select %446, %444, %451 : vector<8x128xi1>, vector<8x128xf32>
    %cst_176 = arith.constant 1.000000e+00 : f32
    %453 = vector.broadcast %cst_176 : f32 to vector<8x128xf32>
    %454 = arith.subf %453, %452 : vector<8x128xf32>
    %455 = arith.mulf %454, %454 : vector<8x128xf32>
    %456 = arith.mulf %449, %455 : vector<8x128xf32>
    %457 = math.log %452 : vector<8x128xf32>
    %cst_177 = arith.constant 0.000000e+00 : f32
    %458 = vector.broadcast %cst_177 : f32 to vector<8x128xf32>
    %459 = arith.subf %458, %457 : vector<8x128xf32>
    %460 = arith.mulf %456, %459 : vector<8x128xf32>
    %461 = arith.addf %438, %460 : vector<8x128xf32>
    %c19 = arith.constant 19 : index
    %c0_178 = arith.constant 0 : index
    %c0_179 = arith.constant 0 : index
    %462 = vector.load %arg2[%c19, %c0_178, %c0_179] : memref<20x8x128xf32, #tpu.memory_space<vmem>>, vector<1x8x128xf32>
    %463 = vector.shape_cast %462 : vector<1x8x128xf32> to vector<8x128xf32>
    %cst_180 = arith.constant 9.99999974E-5 : f32
    %cst_181 = arith.constant 0.999899983 : f32
    %464 = vector.broadcast %cst_180 : f32 to vector<8x128xf32>
    %465 = arith.maximumf %464, %463 : vector<8x128xf32>
    %466 = vector.broadcast %cst_181 : f32 to vector<8x128xf32>
    %467 = arith.minimumf %466, %465 : vector<8x128xf32>
    %c20_i32 = arith.constant 20 : i32
    %468 = vector.broadcast %c20_i32 : i32 to vector<8x128xi32>
    %469 = arith.cmpi eq, %23, %468 : vector<8x128xi32>
    %cst_182 = arith.constant 2.500000e-01 : f32
    %cst_183 = arith.constant 7.500000e-01 : f32
    %470 = vector.broadcast %cst_182 : f32 to vector<8x128xf32>
    %471 = vector.broadcast %cst_183 : f32 to vector<8x128xf32>
    %472 = arith.select %469, %470, %471 : vector<8x128xi1>, vector<8x128xf32>
    %cst_184 = arith.constant 1.000000e+00 : f32
    %473 = vector.broadcast %cst_184 : f32 to vector<8x128xf32>
    %474 = arith.subf %473, %467 : vector<8x128xf32>
    %475 = arith.select %469, %467, %474 : vector<8x128xi1>, vector<8x128xf32>
    %cst_185 = arith.constant 1.000000e+00 : f32
    %476 = vector.broadcast %cst_185 : f32 to vector<8x128xf32>
    %477 = arith.subf %476, %475 : vector<8x128xf32>
    %478 = arith.mulf %477, %477 : vector<8x128xf32>
    %479 = arith.mulf %472, %478 : vector<8x128xf32>
    %480 = math.log %475 : vector<8x128xf32>
    %cst_186 = arith.constant 0.000000e+00 : f32
    %481 = vector.broadcast %cst_186 : f32 to vector<8x128xf32>
    %482 = arith.subf %481, %480 : vector<8x128xf32>
    %483 = arith.mulf %479, %482 : vector<8x128xf32>
    %484 = arith.addf %461, %483 : vector<8x128xf32>
    %cst_187 = arith.constant 0.000000e+00 : f32
    %485 = vector.broadcast %cst_187 : f32 to vector<8x128xf32>
    %486 = arith.select %17, %484, %485 : vector<8x128xi1>, vector<8x128xf32>
    %487 = vector.shape_cast %486 : vector<8x128xf32> to vector<1x8x128xf32>
    %cst_188 = arith.constant dense<0.000000e+00> : vector<1xf32>
    %488 = vector.multi_reduction <add>, %487, %cst_188 [1, 2] : vector<1x8x128xf32> to vector<1xf32>
    %489 = vector.shape_cast %488 : vector<1xf32> to vector<1x1x1xf32>
    %490 = vector.extract %489[0, 0, 0] : f32 from vector<1x1x1xf32>
    %c4_189 = arith.constant 4 : index
    %c0_190 = arith.constant 0 : index
    %c0_191 = arith.constant 0 : index
    %491 = vector.load %arg3[%c4_189, %c0_190, %c0_191] : memref<13x8x128xf32, #tpu.memory_space<vmem>>, vector<1x8x128xf32>
    %492 = vector.shape_cast %491 : vector<1x8x128xf32> to vector<8x128xf32>
    %c5_192 = arith.constant 5 : index
    %c0_193 = arith.constant 0 : index
    %c0_194 = arith.constant 0 : index
    %493 = vector.load %arg3[%c5_192, %c0_193, %c0_194] : memref<13x8x128xf32, #tpu.memory_space<vmem>>, vector<1x8x128xf32>
    %494 = vector.shape_cast %493 : vector<1x8x128xf32> to vector<8x128xf32>
    %c6_195 = arith.constant 6 : index
    %c0_196 = arith.constant 0 : index
    %c0_197 = arith.constant 0 : index
    %495 = vector.load %arg3[%c6_195, %c0_196, %c0_197] : memref<13x8x128xf32, #tpu.memory_space<vmem>>, vector<1x8x128xf32>
    %496 = vector.shape_cast %495 : vector<1x8x128xf32> to vector<8x128xf32>
    %c7_198 = arith.constant 7 : index
    %c0_199 = arith.constant 0 : index
    %c0_200 = arith.constant 0 : index
    %497 = vector.load %arg3[%c7_198, %c0_199, %c0_200] : memref<13x8x128xf32, #tpu.memory_space<vmem>>, vector<1x8x128xf32>
    %498 = vector.shape_cast %497 : vector<1x8x128xf32> to vector<8x128xf32>
    %c11_201 = arith.constant 11 : index
    %c0_202 = arith.constant 0 : index
    %c0_203 = arith.constant 0 : index
    %499 = vector.load %arg3[%c11_201, %c0_202, %c0_203] : memref<13x8x128xf32, #tpu.memory_space<vmem>>, vector<1x8x128xf32>
    %500 = vector.shape_cast %499 : vector<1x8x128xf32> to vector<8x128xf32>
    %c12_204 = arith.constant 12 : index
    %c0_205 = arith.constant 0 : index
    %c0_206 = arith.constant 0 : index
    %501 = vector.load %arg3[%c12_204, %c0_205, %c0_206] : memref<13x8x128xf32, #tpu.memory_space<vmem>>, vector<1x8x128xf32>
    %502 = vector.shape_cast %501 : vector<1x8x128xf32> to vector<8x128xf32>
    %c10_207 = arith.constant 10 : index
    %c0_208 = arith.constant 0 : index
    %c0_209 = arith.constant 0 : index
    %503 = vector.load %arg3[%c10_207, %c0_208, %c0_209] : memref<13x8x128xf32, #tpu.memory_space<vmem>>, vector<1x8x128xf32>
    %504 = vector.shape_cast %503 : vector<1x8x128xf32> to vector<8x128xf32>
    %c0_210 = arith.constant 0 : index
    %c0_211 = arith.constant 0 : index
    %c0_212 = arith.constant 0 : index
    %505 = vector.load %arg3[%c0_210, %c0_211, %c0_212] : memref<13x8x128xf32, #tpu.memory_space<vmem>>, vector<1x8x128xf32>
    %506 = vector.shape_cast %505 : vector<1x8x128xf32> to vector<8x128xf32>
    %cst_213 = arith.constant 0.000000e+00 : f32
    %507 = vector.broadcast %cst_213 : f32 to vector<8x128xf32>
    %508 = arith.select %22, %506, %507 : vector<8x128xi1>, vector<8x128xf32>
    %509 = math.exp %508 : vector<8x128xf32>
    %c1_214 = arith.constant 1 : index
    %c0_215 = arith.constant 0 : index
    %c0_216 = arith.constant 0 : index
    %510 = vector.load %arg3[%c1_214, %c0_215, %c0_216] : memref<13x8x128xf32, #tpu.memory_space<vmem>>, vector<1x8x128xf32>
    %511 = vector.shape_cast %510 : vector<1x8x128xf32> to vector<8x128xf32>
    %cst_217 = arith.constant 0.000000e+00 : f32
    %512 = vector.broadcast %cst_217 : f32 to vector<8x128xf32>
    %513 = arith.select %22, %511, %512 : vector<8x128xi1>, vector<8x128xf32>
    %514 = math.exp %513 : vector<8x128xf32>
    %c2_218 = arith.constant 2 : index
    %c0_219 = arith.constant 0 : index
    %c0_220 = arith.constant 0 : index
    %515 = vector.load %arg3[%c2_218, %c0_219, %c0_220] : memref<13x8x128xf32, #tpu.memory_space<vmem>>, vector<1x8x128xf32>
    %516 = vector.shape_cast %515 : vector<1x8x128xf32> to vector<8x128xf32>
    %cst_221 = arith.constant 0.000000e+00 : f32
    %517 = vector.broadcast %cst_221 : f32 to vector<8x128xf32>
    %518 = arith.select %22, %516, %517 : vector<8x128xi1>, vector<8x128xf32>
    %519 = math.exp %518 : vector<8x128xf32>
    %c3_222 = arith.constant 3 : index
    %c0_223 = arith.constant 0 : index
    %c0_224 = arith.constant 0 : index
    %520 = vector.load %arg3[%c3_222, %c0_223, %c0_224] : memref<13x8x128xf32, #tpu.memory_space<vmem>>, vector<1x8x128xf32>
    %521 = vector.shape_cast %520 : vector<1x8x128xf32> to vector<8x128xf32>
    %cst_225 = arith.constant 0.000000e+00 : f32
    %522 = vector.broadcast %cst_225 : f32 to vector<8x128xf32>
    %523 = arith.select %22, %521, %522 : vector<8x128xi1>, vector<8x128xf32>
    %524 = math.exp %523 : vector<8x128xf32>
    %525 = arith.subf %500, %509 : vector<8x128xf32>
    %526 = arith.subf %502, %514 : vector<8x128xf32>
    %527 = arith.addf %500, %519 : vector<8x128xf32>
    %528 = arith.addf %502, %524 : vector<8x128xf32>
    %529 = arith.subf %500, %492 : vector<8x128xf32>
    %530 = arith.subf %502, %494 : vector<8x128xf32>
    %531 = arith.addf %500, %496 : vector<8x128xf32>
    %532 = arith.addf %502, %498 : vector<8x128xf32>
    %533 = arith.minimumf %527, %531 : vector<8x128xf32>
    %534 = arith.maximumf %525, %529 : vector<8x128xf32>
    %535 = arith.subf %533, %534 : vector<8x128xf32>
    %cst_226 = arith.constant 0.000000e+00 : f32
    %536 = vector.broadcast %cst_226 : f32 to vector<8x128xf32>
    %537 = arith.maximumf %535, %536 : vector<8x128xf32>
    %538 = arith.minimumf %528, %532 : vector<8x128xf32>
    %539 = arith.maximumf %526, %530 : vector<8x128xf32>
    %540 = arith.subf %538, %539 : vector<8x128xf32>
    %cst_227 = arith.constant 0.000000e+00 : f32
    %541 = vector.broadcast %cst_227 : f32 to vector<8x128xf32>
    %542 = arith.maximumf %540, %541 : vector<8x128xf32>
    %543 = arith.mulf %537, %542 : vector<8x128xf32>
    %544 = arith.subf %527, %525 : vector<8x128xf32>
    %cst_228 = arith.constant 0.000000e+00 : f32
    %545 = vector.broadcast %cst_228 : f32 to vector<8x128xf32>
    %546 = arith.maximumf %544, %545 : vector<8x128xf32>
    %547 = arith.subf %528, %526 : vector<8x128xf32>
    %cst_229 = arith.constant 0.000000e+00 : f32
    %548 = vector.broadcast %cst_229 : f32 to vector<8x128xf32>
    %549 = arith.maximumf %547, %548 : vector<8x128xf32>
    %550 = arith.subf %531, %529 : vector<8x128xf32>
    %cst_230 = arith.constant 0.000000e+00 : f32
    %551 = vector.broadcast %cst_230 : f32 to vector<8x128xf32>
    %552 = arith.maximumf %550, %551 : vector<8x128xf32>
    %553 = arith.subf %532, %530 : vector<8x128xf32>
    %cst_231 = arith.constant 0.000000e+00 : f32
    %554 = vector.broadcast %cst_231 : f32 to vector<8x128xf32>
    %555 = arith.maximumf %553, %554 : vector<8x128xf32>
    %556 = arith.mulf %546, %549 : vector<8x128xf32>
    %557 = arith.mulf %552, %555 : vector<8x128xf32>
    %558 = arith.addf %556, %557 : vector<8x128xf32>
    %559 = arith.subf %558, %543 : vector<8x128xf32>
    %cst_232 = arith.constant 9.99999974E-5 : f32
    %560 = vector.broadcast %cst_232 : f32 to vector<8x128xf32>
    %561 = arith.maximumf %559, %560 : vector<8x128xf32>
    %562 = tpu.reciprocal %561 {approx = true} : vector<8x128xf32> -> vector<8x128xf32>
    %563 = arith.mulf %543, %562 : vector<8x128xf32>
    %564 = arith.maximumf %527, %531 : vector<8x128xf32>
    %565 = arith.minimumf %525, %529 : vector<8x128xf32>
    %566 = arith.subf %564, %565 : vector<8x128xf32>
    %cst_233 = arith.constant 0.000000e+00 : f32
    %567 = vector.broadcast %cst_233 : f32 to vector<8x128xf32>
    %568 = arith.maximumf %566, %567 : vector<8x128xf32>
    %569 = arith.maximumf %528, %532 : vector<8x128xf32>
    %570 = arith.minimumf %526, %530 : vector<8x128xf32>
    %571 = arith.subf %569, %570 : vector<8x128xf32>
    %cst_234 = arith.constant 0.000000e+00 : f32
    %572 = vector.broadcast %cst_234 : f32 to vector<8x128xf32>
    %573 = arith.maximumf %571, %572 : vector<8x128xf32>
    %574 = arith.mulf %568, %568 : vector<8x128xf32>
    %575 = arith.mulf %573, %573 : vector<8x128xf32>
    %576 = arith.addf %574, %575 : vector<8x128xf32>
    %cst_235 = arith.constant 9.99999974E-5 : f32
    %577 = vector.broadcast %cst_235 : f32 to vector<8x128xf32>
    %578 = arith.maximumf %576, %577 : vector<8x128xf32>
    %579 = arith.addf %525, %527 : vector<8x128xf32>
    %580 = arith.subf %579, %529 : vector<8x128xf32>
    %581 = arith.subf %580, %531 : vector<8x128xf32>
    %cst_236 = arith.constant 5.000000e-01 : f32
    %582 = vector.broadcast %cst_236 : f32 to vector<8x128xf32>
    %583 = arith.mulf %581, %582 : vector<8x128xf32>
    %584 = arith.addf %526, %528 : vector<8x128xf32>
    %585 = arith.subf %584, %530 : vector<8x128xf32>
    %586 = arith.subf %585, %532 : vector<8x128xf32>
    %cst_237 = arith.constant 5.000000e-01 : f32
    %587 = vector.broadcast %cst_237 : f32 to vector<8x128xf32>
    %588 = arith.mulf %586, %587 : vector<8x128xf32>
    %589 = arith.mulf %583, %583 : vector<8x128xf32>
    %590 = arith.mulf %588, %588 : vector<8x128xf32>
    %591 = arith.addf %589, %590 : vector<8x128xf32>
    %cst_238 = arith.constant 1.000000e-10 : f32
    %592 = vector.broadcast %cst_238 : f32 to vector<8x128xf32>
    %593 = arith.maximumf %555, %592 : vector<8x128xf32>
    %594 = tpu.reciprocal %593 {approx = true} : vector<8x128xf32> -> vector<8x128xf32>
    %595 = arith.mulf %552, %594 : vector<8x128xf32>
    %cst_239 = arith.constant 0.000000e+00 : f32
    %596 = vector.broadcast %cst_239 : f32 to vector<8x128xf32>
    %597 = arith.cmpf olt, %595, %596 : vector<8x128xf32>
    %cst_240 = arith.constant -1.000000e+00 : f32
    %cst_241 = arith.constant 1.000000e+00 : f32
    %598 = vector.broadcast %cst_240 : f32 to vector<8x128xf32>
    %599 = vector.broadcast %cst_241 : f32 to vector<8x128xf32>
    %600 = arith.select %597, %598, %599 : vector<8x128xi1>, vector<8x128xf32>
    %601 = math.absf %595 : vector<8x128xf32>
    %cst_242 = arith.constant 2.41421366 : f32
    %602 = vector.broadcast %cst_242 : f32 to vector<8x128xf32>
    %603 = arith.cmpf ogt, %601, %602 : vector<8x128xf32>
    %cst_243 = arith.constant 0.414213568 : f32
    %604 = vector.broadcast %cst_243 : f32 to vector<8x128xf32>
    %605 = arith.cmpf ogt, %601, %604 : vector<8x128xf32>
    %cst_244 = arith.constant dense<true> : vector<8x128xi1>
    %606 = arith.xori %603, %cst_244 : vector<8x128xi1>
    %607 = arith.andi %605, %606 : vector<8x128xi1>
    %cst_245 = arith.constant 1.000000e-30 : f32
    %608 = vector.broadcast %cst_245 : f32 to vector<8x128xf32>
    %609 = arith.maximumf %601, %608 : vector<8x128xf32>
    %610 = tpu.reciprocal %609 {approx = true} : vector<8x128xf32> -> vector<8x128xf32>
    %cst_246 = arith.constant 0.000000e+00 : f32
    %611 = vector.broadcast %cst_246 : f32 to vector<8x128xf32>
    %612 = arith.subf %611, %610 : vector<8x128xf32>
    %cst_247 = arith.constant 1.000000e+00 : f32
    %613 = vector.broadcast %cst_247 : f32 to vector<8x128xf32>
    %614 = arith.subf %601, %613 : vector<8x128xf32>
    %cst_248 = arith.constant 1.000000e+00 : f32
    %615 = vector.broadcast %cst_248 : f32 to vector<8x128xf32>
    %616 = arith.addf %601, %615 : vector<8x128xf32>
    %617 = tpu.reciprocal %616 {approx = true} : vector<8x128xf32> -> vector<8x128xf32>
    %618 = arith.mulf %614, %617 : vector<8x128xf32>
    %619 = arith.select %607, %618, %601 : vector<8x128xi1>, vector<8x128xf32>
    %620 = arith.select %603, %612, %619 : vector<8x128xi1>, vector<8x128xf32>
    %cst_249 = arith.constant 0.785398185 : f32
    %cst_250 = arith.constant 0.000000e+00 : f32
    %621 = vector.broadcast %cst_249 : f32 to vector<8x128xf32>
    %622 = vector.broadcast %cst_250 : f32 to vector<8x128xf32>
    %623 = arith.select %607, %621, %622 : vector<8x128xi1>, vector<8x128xf32>
    %cst_251 = arith.constant 1.57079637 : f32
    %624 = vector.broadcast %cst_251 : f32 to vector<8x128xf32>
    %625 = arith.select %603, %624, %623 : vector<8x128xi1>, vector<8x128xf32>
    %626 = arith.mulf %620, %620 : vector<8x128xf32>
    %cst_252 = arith.constant 0.0805374458 : f32
    %627 = vector.broadcast %cst_252 : f32 to vector<8x128xf32>
    %628 = arith.mulf %627, %626 : vector<8x128xf32>
    %cst_253 = arith.constant 0.138776854 : f32
    %629 = vector.broadcast %cst_253 : f32 to vector<8x128xf32>
    %630 = arith.subf %628, %629 : vector<8x128xf32>
    %631 = arith.mulf %630, %626 : vector<8x128xf32>
    %cst_254 = arith.constant 0.199777111 : f32
    %632 = vector.broadcast %cst_254 : f32 to vector<8x128xf32>
    %633 = arith.addf %631, %632 : vector<8x128xf32>
    %634 = arith.mulf %633, %626 : vector<8x128xf32>
    %cst_255 = arith.constant 0.333329499 : f32
    %635 = vector.broadcast %cst_255 : f32 to vector<8x128xf32>
    %636 = arith.subf %634, %635 : vector<8x128xf32>
    %637 = arith.mulf %636, %626 : vector<8x128xf32>
    %638 = arith.mulf %637, %620 : vector<8x128xf32>
    %639 = arith.addf %638, %620 : vector<8x128xf32>
    %640 = arith.addf %625, %639 : vector<8x128xf32>
    %641 = arith.mulf %600, %640 : vector<8x128xf32>
    %cst_256 = arith.constant 1.000000e-10 : f32
    %642 = vector.broadcast %cst_256 : f32 to vector<8x128xf32>
    %643 = arith.maximumf %549, %642 : vector<8x128xf32>
    %644 = tpu.reciprocal %643 {approx = true} : vector<8x128xf32> -> vector<8x128xf32>
    %645 = arith.mulf %546, %644 : vector<8x128xf32>
    %cst_257 = arith.constant 0.000000e+00 : f32
    %646 = vector.broadcast %cst_257 : f32 to vector<8x128xf32>
    %647 = arith.cmpf olt, %645, %646 : vector<8x128xf32>
    %cst_258 = arith.constant -1.000000e+00 : f32
    %cst_259 = arith.constant 1.000000e+00 : f32
    %648 = vector.broadcast %cst_258 : f32 to vector<8x128xf32>
    %649 = vector.broadcast %cst_259 : f32 to vector<8x128xf32>
    %650 = arith.select %647, %648, %649 : vector<8x128xi1>, vector<8x128xf32>
    %651 = math.absf %645 : vector<8x128xf32>
    %cst_260 = arith.constant 2.41421366 : f32
    %652 = vector.broadcast %cst_260 : f32 to vector<8x128xf32>
    %653 = arith.cmpf ogt, %651, %652 : vector<8x128xf32>
    %cst_261 = arith.constant 0.414213568 : f32
    %654 = vector.broadcast %cst_261 : f32 to vector<8x128xf32>
    %655 = arith.cmpf ogt, %651, %654 : vector<8x128xf32>
    %cst_262 = arith.constant dense<true> : vector<8x128xi1>
    %656 = arith.xori %653, %cst_262 : vector<8x128xi1>
    %657 = arith.andi %655, %656 : vector<8x128xi1>
    %cst_263 = arith.constant 1.000000e-30 : f32
    %658 = vector.broadcast %cst_263 : f32 to vector<8x128xf32>
    %659 = arith.maximumf %651, %658 : vector<8x128xf32>
    %660 = tpu.reciprocal %659 {approx = true} : vector<8x128xf32> -> vector<8x128xf32>
    %cst_264 = arith.constant 0.000000e+00 : f32
    %661 = vector.broadcast %cst_264 : f32 to vector<8x128xf32>
    %662 = arith.subf %661, %660 : vector<8x128xf32>
    %cst_265 = arith.constant 1.000000e+00 : f32
    %663 = vector.broadcast %cst_265 : f32 to vector<8x128xf32>
    %664 = arith.subf %651, %663 : vector<8x128xf32>
    %cst_266 = arith.constant 1.000000e+00 : f32
    %665 = vector.broadcast %cst_266 : f32 to vector<8x128xf32>
    %666 = arith.addf %651, %665 : vector<8x128xf32>
    %667 = tpu.reciprocal %666 {approx = true} : vector<8x128xf32> -> vector<8x128xf32>
    %668 = arith.mulf %664, %667 : vector<8x128xf32>
    %669 = arith.select %657, %668, %651 : vector<8x128xi1>, vector<8x128xf32>
    %670 = arith.select %653, %662, %669 : vector<8x128xi1>, vector<8x128xf32>
    %cst_267 = arith.constant 0.785398185 : f32
    %cst_268 = arith.constant 0.000000e+00 : f32
    %671 = vector.broadcast %cst_267 : f32 to vector<8x128xf32>
    %672 = vector.broadcast %cst_268 : f32 to vector<8x128xf32>
    %673 = arith.select %657, %671, %672 : vector<8x128xi1>, vector<8x128xf32>
    %cst_269 = arith.constant 1.57079637 : f32
    %674 = vector.broadcast %cst_269 : f32 to vector<8x128xf32>
    %675 = arith.select %653, %674, %673 : vector<8x128xi1>, vector<8x128xf32>
    %676 = arith.mulf %670, %670 : vector<8x128xf32>
    %cst_270 = arith.constant 0.0805374458 : f32
    %677 = vector.broadcast %cst_270 : f32 to vector<8x128xf32>
    %678 = arith.mulf %677, %676 : vector<8x128xf32>
    %cst_271 = arith.constant 0.138776854 : f32
    %679 = vector.broadcast %cst_271 : f32 to vector<8x128xf32>
    %680 = arith.subf %678, %679 : vector<8x128xf32>
    %681 = arith.mulf %680, %676 : vector<8x128xf32>
    %cst_272 = arith.constant 0.199777111 : f32
    %682 = vector.broadcast %cst_272 : f32 to vector<8x128xf32>
    %683 = arith.addf %681, %682 : vector<8x128xf32>
    %684 = arith.mulf %683, %676 : vector<8x128xf32>
    %cst_273 = arith.constant 0.333329499 : f32
    %685 = vector.broadcast %cst_273 : f32 to vector<8x128xf32>
    %686 = arith.subf %684, %685 : vector<8x128xf32>
    %687 = arith.mulf %686, %676 : vector<8x128xf32>
    %688 = arith.mulf %687, %670 : vector<8x128xf32>
    %689 = arith.addf %688, %670 : vector<8x128xf32>
    %690 = arith.addf %675, %689 : vector<8x128xf32>
    %691 = arith.mulf %650, %690 : vector<8x128xf32>
    %692 = arith.subf %641, %691 : vector<8x128xf32>
    %cst_274 = arith.constant 0.405284733 : f32
    %693 = vector.broadcast %cst_274 : f32 to vector<8x128xf32>
    %694 = arith.mulf %693, %692 : vector<8x128xf32>
    %695 = arith.mulf %694, %692 : vector<8x128xf32>
    %cst_275 = arith.constant 1.000000e+00 : f32
    %696 = vector.broadcast %cst_275 : f32 to vector<8x128xf32>
    %697 = arith.subf %696, %563 : vector<8x128xf32>
    %698 = arith.addf %697, %695 : vector<8x128xf32>
    %cst_276 = arith.constant 9.99999974E-5 : f32
    %699 = vector.broadcast %cst_276 : f32 to vector<8x128xf32>
    %700 = arith.maximumf %698, %699 : vector<8x128xf32>
    %701 = tpu.reciprocal %700 {approx = true} : vector<8x128xf32> -> vector<8x128xf32>
    %702 = arith.mulf %695, %701 : vector<8x128xf32>
    %703 = tpu.reciprocal %578 {approx = true} : vector<8x128xf32> -> vector<8x128xf32>
    %704 = arith.mulf %591, %703 : vector<8x128xf32>
    %705 = arith.mulf %695, %702 : vector<8x128xf32>
    %706 = arith.addf %704, %705 : vector<8x128xf32>
    %707 = arith.subf %563, %706 : vector<8x128xf32>
    %cst_277 = arith.constant 1.000000e+00 : f32
    %708 = vector.broadcast %cst_277 : f32 to vector<8x128xf32>
    %709 = arith.subf %708, %707 : vector<8x128xf32>
    %710 = arith.mulf %709, %504 : vector<8x128xf32>
    %cst_278 = arith.constant 0.000000e+00 : f32
    %711 = vector.broadcast %cst_278 : f32 to vector<8x128xf32>
    %712 = arith.select %22, %710, %711 : vector<8x128xi1>, vector<8x128xf32>
    %713 = vector.shape_cast %712 : vector<8x128xf32> to vector<1x8x128xf32>
    %cst_279 = arith.constant dense<0.000000e+00> : vector<1xf32>
    %714 = vector.multi_reduction <add>, %713, %cst_279 [1, 2] : vector<1x8x128xf32> to vector<1xf32>
    %715 = vector.shape_cast %714 : vector<1xf32> to vector<1x1x1xf32>
    %716 = vector.extract %715[0, 0, 0] : f32 from vector<1x1x1xf32>
    %c8_280 = arith.constant 8 : index
    %c0_281 = arith.constant 0 : index
    %c0_282 = arith.constant 0 : index
    %717 = vector.load %arg3[%c8_280, %c0_281, %c0_282] : memref<13x8x128xf32, #tpu.memory_space<vmem>>, vector<1x8x128xf32>
    %718 = vector.shape_cast %717 : vector<1x8x128xf32> to vector<8x128xf32>
    %cst_283 = arith.constant 9.99999974E-5 : f32
    %cst_284 = arith.constant 0.999899983 : f32
    %719 = vector.broadcast %cst_283 : f32 to vector<8x128xf32>
    %720 = arith.maximumf %719, %718 : vector<8x128xf32>
    %721 = vector.broadcast %cst_284 : f32 to vector<8x128xf32>
    %722 = arith.minimumf %721, %720 : vector<8x128xf32>
    %723 = math.log %722 : vector<8x128xf32>
    %724 = arith.mulf %504, %723 : vector<8x128xf32>
    %cst_285 = arith.constant 1.000000e+00 : f32
    %725 = vector.broadcast %cst_285 : f32 to vector<8x128xf32>
    %726 = arith.subf %725, %504 : vector<8x128xf32>
    %cst_286 = arith.constant 1.000000e+00 : f32
    %727 = vector.broadcast %cst_286 : f32 to vector<8x128xf32>
    %728 = arith.subf %727, %722 : vector<8x128xf32>
    %729 = math.log %728 : vector<8x128xf32>
    %730 = arith.mulf %726, %729 : vector<8x128xf32>
    %731 = arith.addf %724, %730 : vector<8x128xf32>
    %cst_287 = arith.constant 0.000000e+00 : f32
    %732 = vector.broadcast %cst_287 : f32 to vector<8x128xf32>
    %733 = arith.subf %732, %731 : vector<8x128xf32>
    %cst_288 = arith.constant 0.000000e+00 : f32
    %734 = vector.broadcast %cst_288 : f32 to vector<8x128xf32>
    %735 = arith.select %22, %733, %734 : vector<8x128xi1>, vector<8x128xf32>
    %736 = vector.shape_cast %735 : vector<8x128xf32> to vector<1x8x128xf32>
    %cst_289 = arith.constant dense<0.000000e+00> : vector<1xf32>
    %737 = vector.multi_reduction <add>, %736, %cst_289 [1, 2] : vector<1x8x128xf32> to vector<1xf32>
    %738 = vector.shape_cast %737 : vector<1xf32> to vector<1x1x1xf32>
    %739 = vector.extract %738[0, 0, 0] : f32 from vector<1x1x1xf32>
    %740 = arith.extui %22 : vector<8x128xi1> to vector<8x128xi32>
    %741 = arith.sitofp %740 : vector<8x128xi32> to vector<8x128xf32>
    %742 = vector.shape_cast %741 : vector<8x128xf32> to vector<1x8x128xf32>
    %cst_290 = arith.constant dense<0.000000e+00> : vector<1xf32>
    %743 = vector.multi_reduction <add>, %742, %cst_290 [1, 2] : vector<1x8x128xf32> to vector<1xf32>
    %744 = vector.shape_cast %743 : vector<1xf32> to vector<1x1x1xf32>
    %745 = vector.extract %744[0, 0, 0] : f32 from vector<1x1x1xf32>
    %746 = tpu.iota {dimensions = array<i32: 0>} : vector<8x128xi32>
    %747 = tpu.iota {dimensions = array<i32: 1>} : vector<8x128xi32>
    %c0_i32_291 = arith.constant 0 : i32
    %748 = vector.broadcast %c0_i32_291 : i32 to vector<8x128xi32>
    %749 = arith.cmpi eq, %746, %748 : vector<8x128xi32>
    %c0_i32_292 = arith.constant 0 : i32
    %750 = vector.broadcast %c0_i32_292 : i32 to vector<8x128xi32>
    %751 = arith.cmpi eq, %747, %750 : vector<8x128xi32>
    %752 = arith.andi %749, %751 : vector<8x128xi1>
    %cst_293 = arith.constant 0.000000e+00 : f32
    %753 = vector.broadcast %490 : f32 to vector<8x128xf32>
    %754 = vector.broadcast %cst_293 : f32 to vector<8x128xf32>
    %755 = arith.select %752, %753, %754 : vector<8x128xi1>, vector<8x128xf32>
    %c1_i32_294 = arith.constant 1 : i32
    %756 = vector.broadcast %c1_i32_294 : i32 to vector<8x128xi32>
    %757 = arith.cmpi eq, %747, %756 : vector<8x128xi32>
    %758 = arith.andi %749, %757 : vector<8x128xi1>
    %cst_295 = arith.constant 0.000000e+00 : f32
    %759 = vector.broadcast %716 : f32 to vector<8x128xf32>
    %760 = vector.broadcast %cst_295 : f32 to vector<8x128xf32>
    %761 = arith.select %758, %759, %760 : vector<8x128xi1>, vector<8x128xf32>
    %762 = arith.addf %755, %761 : vector<8x128xf32>
    %c2_i32_296 = arith.constant 2 : i32
    %763 = vector.broadcast %c2_i32_296 : i32 to vector<8x128xi32>
    %764 = arith.cmpi eq, %747, %763 : vector<8x128xi32>
    %765 = arith.andi %749, %764 : vector<8x128xi1>
    %cst_297 = arith.constant 0.000000e+00 : f32
    %766 = vector.broadcast %739 : f32 to vector<8x128xf32>
    %767 = vector.broadcast %cst_297 : f32 to vector<8x128xf32>
    %768 = arith.select %765, %766, %767 : vector<8x128xi1>, vector<8x128xf32>
    %769 = arith.addf %762, %768 : vector<8x128xf32>
    %c3_i32_298 = arith.constant 3 : i32
    %770 = vector.broadcast %c3_i32_298 : i32 to vector<8x128xi32>
    %771 = arith.cmpi eq, %747, %770 : vector<8x128xi32>
    %772 = arith.andi %749, %771 : vector<8x128xi1>
    %cst_299 = arith.constant 0.000000e+00 : f32
    %773 = vector.broadcast %745 : f32 to vector<8x128xf32>
    %774 = vector.broadcast %cst_299 : f32 to vector<8x128xf32>
    %775 = arith.select %772, %773, %774 : vector<8x128xi1>, vector<8x128xf32>
    %776 = arith.addf %769, %775 : vector<8x128xf32>
    %c0_300 = arith.constant 0 : index
    %c0_301 = arith.constant 0 : index
    %777 = vector.load %arg4[%c0_300, %c0_301] : memref<8x128xf32, #tpu.memory_space<vmem>>, vector<8x128xf32>
    %778 = arith.addf %777, %776 : vector<8x128xf32>
    %c0_302 = arith.constant 0 : index
    %c0_303 = arith.constant 0 : index
    %779 = vector.load %arg4[%c0_302, %c0_303] : memref<8x128xf32, #tpu.memory_space<vmem>>, vector<8x128xf32>
    tpu.vector_store %arg4[%c0_302, %c0_303], %778 {strides = array<i32>} : memref<8x128xf32, #tpu.memory_space<vmem>>, vector<8x128xf32>,
    return
  }
  func.func @transform_0(%arg0: i32, %arg1: i32) -> (i32, i32, i32) {
    %c1_i32 = arith.constant 1 : i32
    %0 = arith.muli %arg0, %c1_i32 : i32
    %1 = arith.addi %0, %arg1 : i32
    %c0_i32 = arith.constant 0 : i32
    %2 = arith.minsi %1, %c0_i32 : i32
    %c0_i32_0 = arith.constant 0 : i32
    %c0_i32_1 = arith.constant 0 : i32
    %c0_i32_2 = arith.constant 0 : i32
    return %c0_i32_0, %c0_i32_1, %2 : i32, i32, i32
  }
  func.func @transform_1(%arg0: i32, %arg1: i32) -> (i32, i32, i32) {
    %c1_i32 = arith.constant 1 : i32
    %0 = arith.muli %arg0, %c1_i32 : i32
    %1 = arith.addi %0, %arg1 : i32
    %c0_i32 = arith.constant 0 : i32
    %2 = arith.minsi %1, %c0_i32 : i32
    %c0_i32_0 = arith.constant 0 : i32
    %c0_i32_1 = arith.constant 0 : i32
    %c0_i32_2 = arith.constant 0 : i32
    return %c0_i32_0, %c0_i32_1, %2 : i32, i32, i32
  }
  func.func @transform_2(%arg0: i32, %arg1: i32) -> (i32, i32) {
    %c0_i32 = arith.constant 0 : i32
    %c0_i32_0 = arith.constant 0 : i32
    return %arg0, %c0_i32 : i32, i32
  }
}

</mosaic_0001>

<llo_original>
// kernel: tpu_custom_call.1
$region0: #{tpu_custom_call.1}
  #allocation0 [shape = 'u32[]', space=smem, size = 0x4, offset = 0x4, fixed_abs, tag = 'smem constant byte address 0x4 - core index']
  #allocation1 [shape = 'u32[144,128]{1,0:T(1,128)}', space=vmem, size = 0x12000, scoped, tag = 'internal scratch']
  %s0 = inlined_call_operand.hbm [shape: f32[20,8,86], index: 0, kind: input, shape index: {}]
  %s1 = inlined_call_operand.hbm [shape: f32[13,8,86], index: 1, kind: input, shape index: {}]
  %s2 = inlined_call_operand.hbm [shape: f32[8,128], index: 2, kind: output, shape index: {}]
  %s3 = sld [smem:[#allocation0]]
  $region30: #{tpu_custom_call.1} parent=0
    _
  %s5 = ssub.s32 1, %s3
  %s6 = scalar_select 0, %s5, %s3
  $region1: #{tpu_custom_call.1} parent=0
    #allocation2 [shape = 'u8[81920]{0}', space=vmem, size = 0x14000, scoped, tag = 'input window, operand 0, single buffered']
    #allocation3 [shape = 's32[1]{0}', space=sflag, size = 0x4, scoped, tag = 'scoped memory for tpu_custom_call.1']
    #allocation4 [shape = 's32[1]{0}', space=sflag, size = 0x4, scoped, tag = 'scoped memory for tpu_custom_call.1']
    #allocation5 [shape = 'u8[53248]{0}', space=vmem, size = 0xd000, scoped, tag = 'input window, operand 1, single buffered']
    #allocation6 [shape = 's32[1]{0}', space=sflag, size = 0x4, scoped, tag = 'scoped memory for tpu_custom_call.1']
    #allocation7 [shape = 'u8[4096]{0}', space=vmem, size = 0x1000, scoped, tag = 'output window, operand 0, single buffered']
    %7 = vsyncpa [#allocation3], 0
    %8 = vsyncpa [#allocation6], 0
    %9 = vsyncpa [#allocation4], 0
    // Predicated region
    $region2: #{tpu_custom_call.1} parent=1 // pred_check
      _
    $region3: #{tpu_custom_call.1} parent=1 // pred_check_branch
      %11 = sbr.rel (0) target = $region5
    $region4: #{tpu_custom_call.1} parent=1 // pred_region
      %s12 = sadd.s32 0, 0
      %p13 = scmp.lt.s32.totalorder %s12, 0
      %s14 = scalar_select %p13, %s12, 0
      %s16 = ssub.s32 2560, 2560
      %17 = vsyncadd [#allocation3], %s16
      %s18 = smul.addr %s14, 128
      %s19 = scalar_lea.hbm %s0, %s18
      %s20 = sshll.u32 [#allocation2], 4
      %s21 = int_to_ptr.vmem [resolvable:$true] %s20
      %26 = dma.hbm_to_vmem [thread:$0]  %s19, 2560, %s21, [#allocation3], 128, 128, 8
    $region5: #{tpu_custom_call.1} parent=1 // pred_fallthru
      _
    // Predicated region
    $region6: #{tpu_custom_call.1} parent=1 // pred_check
      _
    $region7: #{tpu_custom_call.1} parent=1 // pred_check_branch
      %28 = sbr.rel (0) target = $region9
    $region8: #{tpu_custom_call.1} parent=1 // pred_region
      %s29 = sadd.s32 0, 0
      %p30 = scmp.lt.s32.totalorder %s29, 0
      %s31 = scalar_select %p30, %s29, 0
      %s33 = ssub.s32 1664, 1664
      %34 = vsyncadd [#allocation6], %s33
      %s35 = smul.addr %s31, 128
      %s36 = scalar_lea.hbm %s1, %s35
      %s37 = sshll.u32 [#allocation5], 4
      %s38 = int_to_ptr.vmem [resolvable:$true] %s37
      %43 = dma.hbm_to_vmem [thread:$0]  %s36, 1664, %s38, [#allocation6], 128, 128, 8
    $region9: #{tpu_custom_call.1} parent=1 // pred_fallthru
      _
    // Predicated region
    $region10: #{tpu_custom_call.1} parent=1 // pred_check
      _
    $region11: #{tpu_custom_call.1} parent=1 // pred_check_branch
      %45 = sbr.rel (0) target = $region13
    $region12: #{tpu_custom_call.1} parent=1 // pred_region
      %46 = dma.done [#allocation3], 2560
    $region13: #{tpu_custom_call.1} parent=1 // pred_fallthru
      _
    // Predicated region
    $region14: #{tpu_custom_call.1} parent=1 // pred_check
      _
    $region15: #{tpu_custom_call.1} parent=1 // pred_check_branch
      %48 = sbr.rel (0) target = $region17
    $region16: #{tpu_custom_call.1} parent=1 // pred_region
      %49 = dma.done [#allocation6], 1664
    $region17: #{tpu_custom_call.1} parent=1 // pred_fallthru
      _
    %s50 = sadd.s32 0, 0
    %p51 = scmp.lt.s32.totalorder %s50, 0
    %s52 = scalar_select %p51, %s50, 0
    %s53 = sadd.s32 0, 0
    %p54 = scmp.lt.s32.totalorder %s53, 0
    %s55 = scalar_select %p54, %s53, 0
    %s56 = sadd.s32 0, 0
    %p57 = scmp.eq.s32.totalorder 0, 0
    // Predicated region
    $region18: #{tpu_custom_call.1} parent=1 // pred_check
      %p58 = pneg %p57
    $region19: #{tpu_custom_call.1} parent=1 // pred_check_branch
      %60 = sbr.rel (%p58) target = $region21
    $region20: #{tpu_custom_call.1} parent=1 // pred_region
      %61 = vst [vmem:[#allocation7] sm:$0xff] 0.0
    $region21: #{tpu_custom_call.1} parent=1 // pred_fallthru
      _
    %v62 = vlaneseq
    %v63 = vand.u32 %v62, 127
    %v64 = vlaneseq
    %v65 = vshrl.u32 %v64, 7
    %s66 = smul.u32 %s56, 128
    %v67 = vstv %s66
    %v68 = vadd.s32 %v67, %v63
    %v69 = vmul.u32 %v65, 86
    %v70 = vadd.s32 %v69, %v68
    %vm71 = vcmp.lt.s32.totalorder %v68, 86
    %vm72 = vcmp.lt.s32.totalorder %v70, 682
    %vm73 = vmand %vm71, %vm72
    %s74 = scalar_lea.vmem [#allocation5], 72
    %v75 = vld [vmem:[%s74] sm:$0xff]
    %vm76 = vcmp.gt.f32.partialorder %v75, 0.0
    %vm77 = vmand %vm76, %vm73
    %v78 = vcvt.f32.s32.to.zero.pseudo %v75
    %v79 = vld [vmem:[#allocation2] sm:$0xff]
    %v80 = vmax.f32 %v79, 0.0001
    %v81 = vmin.f32 %v80, 0.9999
    %vm82 = vcmp.eq.s32.totalorder %v78, 1
    %v83 = vsel %vm82, 0.25, 0.75
    %v84 = vsub.f32 1.0, %v81
    %v85 = vsel %vm82, %v81, %v84
    %v86 = vsub.f32 1.0, %v85
    %v87 = vmul.f32 %v86, %v86
    %v88 = vmul.f32 %v83, %v87
    %v89 = vlog2.pop %v85
    %v90 = vmul.f32 %v89, 0.6931472
    %v91 = vsub.f32 0.0, %v90
    %v92 = vmul.f32 %v88, %v91
    %v93 = vadd.f32 %v92, 0.0
    %s94 = scalar_lea.vmem [#allocation2], 8
    %v95 = vld [vmem:[%s94] sm:$0xff]
    %v96 = vmax.f32 %v95, 0.0001
    %v97 = vmin.f32 %v96, 0.9999
    %vm98 = vcmp.eq.s32.totalorder %v78, 2
    %v99 = vsel %vm98, 0.25, 0.75
    %v100 = vsub.f32 1.0, %v97
    %v101 = vsel %vm98, %v97, %v100
    %v102 = vsub.f32 1.0, %v101
    %v103 = vmul.f32 %v102, %v102
    %v104 = vmul.f32 %v99, %v103
    %v105 = vlog2.pop %v101
    %v106 = vmul.f32 %v105, 0.6931472
    %v107 = vsub.f32 0.0, %v106
    %v108 = vmul.f32 %v104, %v107
    %v109 = vadd.f32 %v93, %v108
    %s110 = scalar_lea.vmem [#allocation2], 16
    %v111 = vld [vmem:[%s110] sm:$0xff]
    %v112 = vmax.f32 %v111, 0.0001
    %v113 = vmin.f32 %v112, 0.9999
    %vm114 = vcmp.eq.s32.totalorder %v78, 3
    %v115 = vsel %vm114, 0.25, 0.75
    %v116 = vsub.f32 1.0, %v113
    %v117 = vsel %vm114, %v113, %v116
    %v118 = vsub.f32 1.0, %v117
    %v119 = vmul.f32 %v118, %v118
    %v120 = vmul.f32 %v115, %v119
    %v121 = vlog2.pop %v117
    %v122 = vmul.f32 %v121, 0.6931472
    %v123 = vsub.f32 0.0, %v122
    %v124 = vmul.f32 %v120, %v123
    %v125 = vadd.f32 %v109, %v124
    %s126 = scalar_lea.vmem [#allocation2], 24
    %v127 = vld [vmem:[%s126] sm:$0xff]
    %v128 = vmax.f32 %v127, 0.0001
    %v129 = vmin.f32 %v128, 0.9999
    %vm130 = vcmp.eq.s32.totalorder %v78, 4
    %v131 = vsel %vm130, 0.25, 0.75
    %v132 = vsub.f32 1.0, %v129
    %v133 = vsel %vm130, %v129, %v132
    %v134 = vsub.f32 1.0, %v133
    %v135 = vmul.f32 %v134, %v134
    %v136 = vmul.f32 %v131, %v135
    %v137 = vlog2.pop %v133
    %v138 = vmul.f32 %v137, 0.6931472
    %v139 = vsub.f32 0.0, %v138
    %v140 = vmul.f32 %v136, %v139
    %v141 = vadd.f32 %v125, %v140
    %s142 = scalar_lea.vmem [#allocation2], 32
    %v143 = vld [vmem:[%s142] sm:$0xff]
    %v144 = vmax.f32 %v143, 0.0001
    %v145 = vmin.f32 %v144, 0.9999
    %vm146 = vcmp.eq.s32.totalorder %v78, 5
    %v147 = vsel %vm146, 0.25, 0.75
    %v148 = vsub.f32 1.0, %v145
    %v149 = vsel %vm146, %v145, %v148
    %v150 = vsub.f32 1.0, %v149
    %v151 = vmul.f32 %v150, %v150
    %v152 = vmul.f32 %v147, %v151
    %v153 = vlog2.pop %v149
    %v154 = vmul.f32 %v153, 0.6931472
    %v155 = vsub.f32 0.0, %v154
    %v156 = vmul.f32 %v152, %v155
    %v157 = vadd.f32 %v141, %v156
    %s158 = scalar_lea.vmem [#allocation2], 40
    %v159 = vld [vmem:[%s158] sm:$0xff]
    %v160 = vmax.f32 %v159, 0.0001
    %v161 = vmin.f32 %v160, 0.9999
    %vm162 = vcmp.eq.s32.totalorder %v78, 6
    %v163 = vsel %vm162, 0.25, 0.75
    %v164 = vsub.f32 1.0, %v161
    %v165 = vsel %vm162, %v161, %v164
    %v166 = vsub.f32 1.0, %v165
    %v167 = vmul.f32 %v166, %v166
    %v168 = vmul.f32 %v163, %v167
    %v169 = vlog2.pop %v165
    %v170 = vmul.f32 %v169, 0.6931472
    %v171 = vsub.f32 0.0, %v170
    %v172 = vmul.f32 %v168, %v171
    %v173 = vadd.f32 %v157, %v172
    %s174 = scalar_lea.vmem [#allocation2], 48
    %v175 = vld [vmem:[%s174] sm:$0xff]
    %v176 = vmax.f32 %v175, 0.0001
    %v177 = vmin.f32 %v176, 0.9999
    %vm178 = vcmp.eq.s32.totalorder %v78, 7
    %v179 = vsel %vm178, 0.25, 0.75
    %v180 = vsub.f32 1.0, %v177
    %v181 = vsel %vm178, %v177, %v180
    %v182 = vsub.f32 1.0, %v181
    %v183 = vmul.f32 %v182, %v182
    %v184 = vmul.f32 %v179, %v183
    %v185 = vlog2.pop %v181
    %v186 = vmul.f32 %v185, 0.6931472
    %v187 = vsub.f32 0.0, %v186
    %v188 = vmul.f32 %v184, %v187
    %v189 = vadd.f32 %v173, %v188
    %s190 = scalar_lea.vmem [#allocation2], 56
    %v191 = vld [vmem:[%s190] sm:$0xff]
    %v192 = vmax.f32 %v191, 0.0001
    %v193 = vmin.f32 %v192, 0.9999
    %vm194 = vcmp.eq.s32.totalorder %v78, 8
    %v195 = vsel %vm194, 0.25, 0.75
    %v196 = vsub.f32 1.0, %v193
    %v197 = vsel %vm194, %v193, %v196
    %v198 = vsub.f32 1.0, %v197
    %v199 = vmul.f32 %v198, %v198
    %v200 = vmul.f32 %v195, %v199
    %v201 = vlog2.pop %v197
    %v202 = vmul.f32 %v201, 0.6931472
    %v203 = vsub.f32 0.0, %v202
    %v204 = vmul.f32 %v200, %v203
    %v205 = vadd.f32 %v189, %v204
    %s206 = scalar_lea.vmem [#allocation2], 64
    %v207 = vld [vmem:[%s206] sm:$0xff]
    %v208 = vmax.f32 %v207, 0.0001
    %v209 = vmin.f32 %v208, 0.9999
    %vm210 = vcmp.eq.s32.totalorder %v78, 9
    %v211 = vsel %vm210, 0.25, 0.75
    %v212 = vsub.f32 1.0, %v209
    %v213 = vsel %vm210, %v209, %v212
    %v214 = vsub.f32 1.0, %v213
    %v215 = vmul.f32 %v214, %v214
    %v216 = vmul.f32 %v211, %v215
    %v217 = vlog2.pop %v213
    %v218 = vmul.f32 %v217, 0.6931472
    %v219 = vsub.f32 0.0, %v218
    %v220 = vmul.f32 %v216, %v219
    %v221 = vadd.f32 %v205, %v220
    %s222 = scalar_lea.vmem [#allocation2], 72
    %v223 = vld [vmem:[%s222] sm:$0xff]
    %v224 = vmax.f32 %v223, 0.0001
    %v225 = vmin.f32 %v224, 0.9999
    %vm226 = vcmp.eq.s32.totalorder %v78, 10
    %v227 = vsel %vm226, 0.25, 0.75
    %v228 = vsub.f32 1.0, %v225
    %v229 = vsel %vm226, %v225, %v228
    %v230 = vsub.f32 1.0, %v229
    %v231 = vmul.f32 %v230, %v230
    %v232 = vmul.f32 %v227, %v231
    %v233 = vlog2.pop %v229
    %v234 = vmul.f32 %v233, 0.6931472
    %v235 = vsub.f32 0.0, %v234
    %v236 = vmul.f32 %v232, %v235
    %v237 = vadd.f32 %v221, %v236
    %s238 = scalar_lea.vmem [#allocation2], 80
    %v239 = vld [vmem:[%s238] sm:$0xff]
    %v240 = vmax.f32 %v239, 0.0001
    %v241 = vmin.f32 %v240, 0.9999
    %vm242 = vcmp.eq.s32.totalorder %v78, 11
    %v243 = vsel %vm242, 0.25, 0.75
    %v244 = vsub.f32 1.0, %v241
    %v245 = vsel %vm242, %v241, %v244
    %v246 = vsub.f32 1.0, %v245
    %v247 = vmul.f32 %v246, %v246
    %v248 = vmul.f32 %v243, %v247
    %v249 = vlog2.pop %v245
    %v250 = vmul.f32 %v249, 0.6931472
    %v251 = vsub.f32 0.0, %v250
    %v252 = vmul.f32 %v248, %v251
    %v253 = vadd.f32 %v237, %v252
    %s254 = scalar_lea.vmem [#allocation2], 88
    %v255 = vld [vmem:[%s254] sm:$0xff]
    %v256 = vmax.f32 %v255, 0.0001
    %v257 = vmin.f32 %v256, 0.9999
    %vm258 = vcmp.eq.s32.totalorder %v78, 12
    %v259 = vsel %vm258, 0.25, 0.75
    %v260 = vsub.f32 1.0, %v257
    %v261 = vsel %vm258, %v257, %v260
    %v262 = vsub.f32 1.0, %v261
    %v263 = vmul.f32 %v262, %v262
    %v264 = vmul.f32 %v259, %v263
    %v265 = vlog2.pop %v261
    %v266 = vmul.f32 %v265, 0.6931472
    %v267 = vsub.f32 0.0, %v266
    %v268 = vmul.f32 %v264, %v267
    %v269 = vadd.f32 %v253, %v268
    %s270 = scalar_lea.vmem [#allocation2], 96
    %v271 = vld [vmem:[%s270] sm:$0xff]
    %v272 = vmax.f32 %v271, 0.0001
    %v273 = vmin.f32 %v272, 0.9999
    %vm274 = vcmp.eq.s32.totalorder %v78, 13
    %v275 = vsel %vm274, 0.25, 0.75
    %v276 = vsub.f32 1.0, %v273
    %v277 = vsel %vm274, %v273, %v276
    %v278 = vsub.f32 1.0, %v277
    %v279 = vmul.f32 %v278, %v278
    %v280 = vmul.f32 %v275, %v279
    %v281 = vlog2.pop %v277
    %v282 = vmul.f32 %v281, 0.6931472
    %v283 = vsub.f32 0.0, %v282
    %v284 = vmul.f32 %v280, %v283
    %v285 = vadd.f32 %v269, %v284
    %s286 = scalar_lea.vmem [#allocation2], 104
    %v287 = vld [vmem:[%s286] sm:$0xff]
    %v288 = vmax.f32 %v287, 0.0001
    %v289 = vmin.f32 %v288, 0.9999
    %vm290 = vcmp.eq.s32.totalorder %v78, 14
    %v291 = vsel %vm290, 0.25, 0.75
    %v292 = vsub.f32 1.0, %v289
    %v293 = vsel %vm290, %v289, %v292
    %v294 = vsub.f32 1.0, %v293
    %v295 = vmul.f32 %v294, %v294
    %v296 = vmul.f32 %v291, %v295
    %v297 = vlog2.pop %v293
    %v298 = vmul.f32 %v297, 0.6931472
    %v299 = vsub.f32 0.0, %v298
    %v300 = vmul.f32 %v296, %v299
    %v301 = vadd.f32 %v285, %v300
    %s302 = scalar_lea.vmem [#allocation2], 112
    %v303 = vld [vmem:[%s302] sm:$0xff]
    %v304 = vmax.f32 %v303, 0.0001
    %v305 = vmin.f32 %v304, 0.9999
    %vm306 = vcmp.eq.s32.totalorder %v78, 15
    %v307 = vsel %vm306, 0.25, 0.75
    %v308 = vsub.f32 1.0, %v305
    %v309 = vsel %vm306, %v305, %v308
    %v310 = vsub.f32 1.0, %v309
    %v311 = vmul.f32 %v310, %v310
    %v312 = vmul.f32 %v307, %v311
    %v313 = vlog2.pop %v309
    %v314 = vmul.f32 %v313, 0.6931472
    %v315 = vsub.f32 0.0, %v314
    %v316 = vmul.f32 %v312, %v315
    %v317 = vadd.f32 %v301, %v316
    %s318 = scalar_lea.vmem [#allocation2], 120
    %v319 = vld [vmem:[%s318] sm:$0xff]
    %v320 = vmax.f32 %v319, 0.0001
    %v321 = vmin.f32 %v320, 0.9999
    %vm322 = vcmp.eq.s32.totalorder %v78, 16
    %v323 = vsel %vm322, 0.25, 0.75
    %v324 = vsub.f32 1.0, %v321
    %v325 = vsel %vm322, %v321, %v324
    %v326 = vsub.f32 1.0, %v325
    %v327 = vmul.f32 %v326, %v326
    %v328 = vmul.f32 %v323, %v327
    %v329 = vlog2.pop %v325
    %v330 = vmul.f32 %v329, 0.6931472
    %v331 = vsub.f32 0.0, %v330
    %v332 = vmul.f32 %v328, %v331
    %v333 = vadd.f32 %v317, %v332
    %s334 = scalar_lea.vmem [#allocation2], 128
    %v335 = vld [vmem:[%s334] sm:$0xff]
    %v336 = vmax.f32 %v335, 0.0001
    %v337 = vmin.f32 %v336, 0.9999
    %vm338 = vcmp.eq.s32.totalorder %v78, 17
    %v339 = vsel %vm338, 0.25, 0.75
    %v340 = vsub.f32 1.0, %v337
    %v341 = vsel %vm338, %v337, %v340
    %v342 = vsub.f32 1.0, %v341
    %v343 = vmul.f32 %v342, %v342
    %v344 = vmul.f32 %v339, %v343
    %v345 = vlog2.pop %v341
    %v346 = vmul.f32 %v345, 0.6931472
    %v347 = vsub.f32 0.0, %v346
    %v348 = vmul.f32 %v344, %v347
    %v349 = vadd.f32 %v333, %v348
    %s350 = scalar_lea.vmem [#allocation2], 136
    %v351 = vld [vmem:[%s350] sm:$0xff]
    %v352 = vmax.f32 %v351, 0.0001
    %v353 = vmin.f32 %v352, 0.9999
    %vm354 = vcmp.eq.s32.totalorder %v78, 18
    %v355 = vsel %vm354, 0.25, 0.75
    %v356 = vsub.f32 1.0, %v353
    %v357 = vsel %vm354, %v353, %v356
    %v358 = vsub.f32 1.0, %v357
    %v359 = vmul.f32 %v358, %v358
    %v360 = vmul.f32 %v355, %v359
    %v361 = vlog2.pop %v357
    %v362 = vmul.f32 %v361, 0.6931472
    %v363 = vsub.f32 0.0, %v362
    %v364 = vmul.f32 %v360, %v363
    %v365 = vadd.f32 %v349, %v364
    %s366 = scalar_lea.vmem [#allocation2], 144
    %v367 = vld [vmem:[%s366] sm:$0xff]
    %v368 = vmax.f32 %v367, 0.0001
    %v369 = vmin.f32 %v368, 0.9999
    %vm370 = vcmp.eq.s32.totalorder %v78, 19
    %v371 = vsel %vm370, 0.25, 0.75
    %v372 = vsub.f32 1.0, %v369
    %v373 = vsel %vm370, %v369, %v372
    %v374 = vsub.f32 1.0, %v373
    %v375 = vmul.f32 %v374, %v374
    %v376 = vmul.f32 %v371, %v375
    %v377 = vlog2.pop %v373
    %v378 = vmul.f32 %v377, 0.6931472
    %v379 = vsub.f32 0.0, %v378
    %v380 = vmul.f32 %v376, %v379
    %v381 = vadd.f32 %v365, %v380
    %s382 = scalar_lea.vmem [#allocation2], 152
    %v383 = vld [vmem:[%s382] sm:$0xff]
    %v384 = vmax.f32 %v383, 0.0001
    %v385 = vmin.f32 %v384, 0.9999
    %vm386 = vcmp.eq.s32.totalorder %v78, 20
    %v387 = vsel %vm386, 0.25, 0.75
    %v388 = vsub.f32 1.0, %v385
    %v389 = vsel %vm386, %v385, %v388
    %v390 = vsub.f32 1.0, %v389
    %v391 = vmul.f32 %v390, %v390
    %v392 = vmul.f32 %v387, %v391
    %v393 = vlog2.pop %v389
    %v394 = vmul.f32 %v393, 0.6931472
    %v395 = vsub.f32 0.0, %v394
    %v396 = vmul.f32 %v392, %v395
    %v397 = vadd.f32 %v381, %v396
    %v398 = vsel %vm73, %v397, 0.0
    %399 = vadd.xlane.f32.xlu0 %v398
    %v400 = vpop.xlane.xlu0 %399
    %v401 = vrot.slane %v400, 4
    %v402 = vadd.f32 %v400, %v401
    %v403 = vrot.slane %v402, 2
    %v404 = vadd.f32 %v402, %v403
    %v405 = vrot.slane %v404, 1
    %v406 = vadd.f32 %v404, %v405
    %s407 = vtos %v406
    %s408 = scalar_lea.vmem [#allocation5], 32
    %v409 = vld [vmem:[%s408] sm:$0xff]
    %s410 = scalar_lea.vmem [#allocation5], 40
    %v411 = vld [vmem:[%s410] sm:$0xff]
    %s412 = scalar_lea.vmem [#allocation5], 48
    %v413 = vld [vmem:[%s412] sm:$0xff]
    %s414 = scalar_lea.vmem [#allocation5], 56
    %v415 = vld [vmem:[%s414] sm:$0xff]
    %s416 = scalar_lea.vmem [#allocation5], 88
    %v417 = vld [vmem:[%s416] sm:$0xff]
    %s418 = scalar_lea.vmem [#allocation5], 96
    %v419 = vld [vmem:[%s418] sm:$0xff]
    %s420 = scalar_lea.vmem [#allocation5], 80
    %v421 = vld [vmem:[%s420] sm:$0xff]
    %v422 = vld [vmem:[#allocation5] sm:$0xff]
    %v423 = vsel %vm77, %v422, 0.0
    %v424 = vmul.f32 %v423, 1.442695
    %v425 = vpow.pop %v424
    %s426 = scalar_lea.vmem [#allocation5], 8
    %v427 = vld [vmem:[%s426] sm:$0xff]
    %v428 = vsel %vm77, %v427, 0.0
    %v429 = vmul.f32 %v428, 1.442695
    %v430 = vpow.pop %v429
    %s431 = scalar_lea.vmem [#allocation5], 16
    %v432 = vld [vmem:[%s431] sm:$0xff]
    %v433 = vsel %vm77, %v432, 0.0
    %v434 = vmul.f32 %v433, 1.442695
    %v435 = vpow.pop %v434
    %s436 = scalar_lea.vmem [#allocation5], 24
    %v437 = vld [vmem:[%s436] sm:$0xff]
    %v438 = vsel %vm77, %v437, 0.0
    %v439 = vmul.f32 %v438, 1.442695
    %v440 = vpow.pop %v439
    %v441 = vsub.f32 %v417, %v425
    %v442 = vsub.f32 %v419, %v430
    %v443 = vadd.f32 %v417, %v435
    %v444 = vadd.f32 %v419, %v440
    %v445 = vsub.f32 %v417, %v409
    %v446 = vsub.f32 %v419, %v411
    %v447 = vadd.f32 %v417, %v413
    %v448 = vadd.f32 %v419, %v415
    %v449 = vmin.f32 %v443, %v447
    %v450 = vmax.f32 %v441, %v445
    %v451 = vsub.f32 %v449, %v450
    %v452 = vmax.f32 %v451, 0.0
    %v453 = vmin.f32 %v444, %v448
    %v454 = vmax.f32 %v442, %v446
    %v455 = vsub.f32 %v453, %v454
    %v456 = vmax.f32 %v455, 0.0
    %v457 = vmul.f32 %v452, %v456
    %v458 = vsub.f32 %v443, %v441
    %v459 = vmax.f32 %v458, 0.0
    %v460 = vsub.f32 %v444, %v442
    %v461 = vmax.f32 %v460, 0.0
    %v462 = vsub.f32 %v447, %v445
    %v463 = vmax.f32 %v462, 0.0
    %v464 = vsub.f32 %v448, %v446
    %v465 = vmax.f32 %v464, 0.0
    %v466 = vmul.f32 %v459, %v461
    %v467 = vmul.f32 %v463, %v465
    %v468 = vadd.f32 %v466, %v467
    %v469 = vsub.f32 %v468, %v457
    %v470 = vmax.f32 %v469, 0.0001
    %v471 = vrcp.pop %v470
    %v472 = vmul.f32 %v457, %v471
    %v473 = vmax.f32 %v443, %v447
    %v474 = vmin.f32 %v441, %v445
    %v475 = vsub.f32 %v473, %v474
    %v476 = vmax.f32 %v475, 0.0
    %v477 = vmax.f32 %v444, %v448
    %v478 = vmin.f32 %v442, %v446
    %v479 = vsub.f32 %v477, %v478
    %v480 = vmax.f32 %v479, 0.0
    %v481 = vmul.f32 %v476, %v476
    %v482 = vmul.f32 %v480, %v480
    %v483 = vadd.f32 %v481, %v482
    %v484 = vmax.f32 %v483, 0.0001
    %v485 = vadd.f32 %v441, %v443
    %v486 = vsub.f32 %v485, %v445
    %v487 = vsub.f32 %v486, %v447
    %v488 = vmul.f32 %v487, 0.5
    %v489 = vadd.f32 %v442, %v444
    %v490 = vsub.f32 %v489, %v446
    %v491 = vsub.f32 %v490, %v448
    %v492 = vmul.f32 %v491, 0.5
    %v493 = vmul.f32 %v488, %v488
    %v494 = vmul.f32 %v492, %v492
    %v495 = vadd.f32 %v493, %v494
    %v496 = vmax.f32 %v465, 1e-10
    %v497 = vrcp.pop %v496
    %v498 = vmul.f32 %v463, %v497
    %vm499 = vcmp.lt.f32.partialorder %v498, 0.0
    %v500 = vsel %vm499, -1.0, 1.0
    %v501 = vand.u32 2147483647, %v498
    %vm502 = vcmp.gt.f32.partialorder %v501, 2.4142137
    %vm503 = vcmp.gt.f32.partialorder %v501, 0.41421357
    %vm504 = vmxor %vm502, 1
    %vm505 = vmand %vm503, %vm504
    %v506 = vmax.f32 %v501, 1e-30
    %v507 = vrcp.pop %v506
    %v508 = vsub.f32 0.0, %v507
    %v509 = vsub.f32 %v501, 1.0
    %v510 = vadd.f32 %v501, 1.0
    %v511 = vrcp.pop %v510
    %v512 = vmul.f32 %v509, %v511
    %v513 = vsel %vm505, %v512, %v501
    %v514 = vsel %vm502, %v508, %v513
    %v515 = vsel %vm505, 0.7853982, 0.0
    %v516 = vsel %vm502, 1.5707964, %v515
    %v517 = vmul.f32 %v514, %v514
    %v518 = vmul.f32 %v517, 0.080537446
    %v519 = vsub.f32 %v518, 0.13877685
    %v520 = vmul.f32 %v519, %v517
    %v521 = vadd.f32 %v520, 0.19977711
    %v522 = vmul.f32 %v521, %v517
    %v523 = vsub.f32 %v522, 0.3333295
    %v524 = vmul.f32 %v523, %v517
    %v525 = vmul.f32 %v524, %v514
    %v526 = vadd.f32 %v525, %v514
    %v527 = vadd.f32 %v516, %v526
    %v528 = vmul.f32 %v500, %v527
    %v529 = vmax.f32 %v461, 1e-10
    %v530 = vrcp.pop %v529
    %v531 = vmul.f32 %v459, %v530
    %vm532 = vcmp.lt.f32.partialorder %v531, 0.0
    %v533 = vsel %vm532, -1.0, 1.0
    %v534 = vand.u32 2147483647, %v531
    %vm535 = vcmp.gt.f32.partialorder %v534, 2.4142137
    %vm536 = vcmp.gt.f32.partialorder %v534, 0.41421357
    %vm537 = vmxor %vm535, 1
    %vm538 = vmand %vm536, %vm537
    %v539 = vmax.f32 %v534, 1e-30
    %v540 = vrcp.pop %v539
    %v541 = vsub.f32 0.0, %v540
    %v542 = vsub.f32 %v534, 1.0
    %v543 = vadd.f32 %v534, 1.0
    %v544 = vrcp.pop %v543
    %v545 = vmul.f32 %v542, %v544
    %v546 = vsel %vm538, %v545, %v534
    %v547 = vsel %vm535, %v541, %v546
    %v548 = vsel %vm538, 0.7853982, 0.0
    %v549 = vsel %vm535, 1.5707964, %v548
    %v550 = vmul.f32 %v547, %v547
    %v551 = vmul.f32 %v550, 0.080537446
    %v552 = vsub.f32 %v551, 0.13877685
    %v553 = vmul.f32 %v552, %v550
    %v554 = vadd.f32 %v553, 0.19977711
    %v555 = vmul.f32 %v554, %v550
    %v556 = vsub.f32 %v555, 0.3333295
    %v557 = vmul.f32 %v556, %v550
    %v558 = vmul.f32 %v557, %v547
    %v559 = vadd.f32 %v558, %v547
    %v560 = vadd.f32 %v549, %v559
    %v561 = vmul.f32 %v533, %v560
    %v562 = vsub.f32 %v528, %v561
    %v563 = vmul.f32 %v562, 0.40528473
    %v564 = vmul.f32 %v563, %v562
    %v565 = vsub.f32 1.0, %v472
    %v566 = vadd.f32 %v565, %v564
    %v567 = vmax.f32 %v566, 0.0001
    %v568 = vrcp.pop %v567
    %v569 = vmul.f32 %v564, %v568
    %v570 = vrcp.pop %v484
    %v571 = vmul.f32 %v495, %v570
    %v572 = vmul.f32 %v564, %v569
    %v573 = vadd.f32 %v571, %v572
    %v574 = vsub.f32 %v472, %v573
    %v575 = vsub.f32 1.0, %v574
    %v576 = vmul.f32 %v575, %v421
    %v577 = vsel %vm77, %v576, 0.0
    %578 = vadd.xlane.f32.xlu0 %v577
    %v579 = vpop.xlane.xlu0 %578
    %v580 = vrot.slane %v579, 4
    %v581 = vadd.f32 %v579, %v580
    %v582 = vrot.slane %v581, 2
    %v583 = vadd.f32 %v581, %v582
    %v584 = vrot.slane %v583, 1
    %v585 = vadd.f32 %v583, %v584
    %s586 = vtos %v585
    %s587 = scalar_lea.vmem [#allocation5], 64
    %v588 = vld [vmem:[%s587] sm:$0xff]
    %v589 = vmax.f32 %v588, 0.0001
    %v590 = vmin.f32 %v589, 0.9999
    %v591 = vlog2.pop %v590
    %v592 = vmul.f32 %v591, 0.6931472
    %v593 = vmul.f32 %v421, %v592
    %v594 = vsub.f32 1.0, %v421
    %v595 = vsub.f32 1.0, %v590
    %v596 = vlog2.pop %v595
    %v597 = vmul.f32 %v596, 0.6931472
    %v598 = vmul.f32 %v594, %v597
    %v599 = vadd.f32 %v593, %v598
    %v600 = vsub.f32 0.0, %v599
    %v601 = vsel %vm77, %v600, 0.0
    %602 = vadd.xlane.f32.xlu0 %v601
    %v603 = vpop.xlane.xlu0 %602
    %v604 = vrot.slane %v603, 4
    %v605 = vadd.f32 %v603, %v604
    %v606 = vrot.slane %v605, 2
    %v607 = vadd.f32 %v605, %v606
    %v608 = vrot.slane %v607, 1
    %v609 = vadd.f32 %v607, %v608
    %s610 = vtos %v609
    %v611 = vsel %vm77, 1, 0
    %v612 = vcvt.s32.f32 %v611
    %613 = vadd.xlane.f32.xlu0 %v612
    %v614 = vpop.xlane.xlu0 %613
    %v615 = vrot.slane %v614, 4
    %v616 = vadd.f32 %v614, %v615
    %v617 = vrot.slane %v616, 2
    %v618 = vadd.f32 %v616, %v617
    %v619 = vrot.slane %v618, 1
    %v620 = vadd.f32 %v618, %v619
    %s621 = vtos %v620
    %vm622 = vcmp.eq.s32.totalorder %v65, 0
    %vm623 = vcmp.eq.s32.totalorder %v63, 0
    %vm624 = vmand %vm622, %vm623
    %v625 = vstv %s407
    %v626 = vsel %vm624, %v625, 0.0
    %vm627 = vcmp.eq.s32.totalorder %v63, 1
    %vm628 = vmand %vm622, %vm627
    %v629 = vstv %s586
    %v630 = vsel %vm628, %v629, 0.0
    %v631 = vadd.f32 %v626, %v630
    %vm632 = vcmp.eq.s32.totalorder %v63, 2
    %vm633 = vmand %vm622, %vm632
    %v634 = vstv %s610
    %v635 = vsel %vm633, %v634, 0.0
    %v636 = vadd.f32 %v631, %v635
    %vm637 = vcmp.eq.s32.totalorder %v63, 3
    %vm638 = vmand %vm622, %vm637
    %v639 = vstv %s621
    %v640 = vsel %vm638, %v639, 0.0
    %v641 = vadd.f32 %v636, %v640
    %v642 = vld [vmem:[#allocation7] sm:$0xff]
    %v643 = vadd.f32 %v642, %v641
    %644 = vst [vmem:[#allocation7] sm:$0xff] %v643
    // Predicated region
    $region22: #{tpu_custom_call.1} parent=1 // pred_check
      _
    $region23: #{tpu_custom_call.1} parent=1 // pred_check_branch
      %646 = sbr.rel (0) target = $region25
    $region24: #{tpu_custom_call.1} parent=1 // pred_region
      %s648 = ssub.s32 128, 128
      %649 = vsyncadd [#allocation4], %s648
      %s651 = sshll.u32 [#allocation7], 4
      %s652 = int_to_ptr.vmem [resolvable:$true] %s651
      %654 = dma.vmem_to_hbm [thread:$0]  %s652, 128, %s2, [#allocation4]
    $region25: #{tpu_custom_call.1} parent=1 // pred_fallthru
      _
    // Predicated region
    $region26: #{tpu_custom_call.1} parent=1 // pred_check
      _
    $region27: #{tpu_custom_call.1} parent=1 // pred_check_branch
      %656 = sbr.rel (0) target = $region29
    $region28: #{tpu_custom_call.1} parent=1 // pred_region
      %657 = dma.done [#allocation4], 128
    $region29: #{tpu_custom_call.1} parent=1 // pred_fallthru
      _
    %658 = vsyncpa [#allocation3], 1
    %659 = vsyncpa [#allocation6], 1
    %660 = vsyncpa [#allocation4], 1

</llo_original>
